<compile_context>
chip_gen: v7x
topology: tpu7x:2x2x1
jax: 0.10.0
libtpu: 0.0.40
codegen_flags: <defaults>
</compile_context>

<pallas_src>
import jax
import jax.numpy as jnp
from jax.experimental import pallas as pl
from jax.experimental.pallas import tpu as pltpu


# ---------------------------------------------------------------------------
# Kernels
# ---------------------------------------------------------------------------

def _se_fused_kernel(x_ref, w1t_ref, w2t_ref, alpha_ref, o_ref):
    """One batch block: pool + excitation MLP + gate, all in VMEM.

    x_ref:    (B_TILE, C, HW)  native dtype, NCHW-flattened (HW on lanes)
    w1t_ref:  (C, Cr)  f32, 1/HW pool scale pre-folded into the rows
    w2t_ref:  (Cr, C)  f32
    alpha_ref:(1,) SMEM  shared PReLU slope
    o_ref:    (B_TILE, C, HW)
    """
    # Squeeze: f32-accumulated sum over the spatial (lane) axis -> (B, C).
    pooled = jnp.sum(x_ref[...], axis=-1, dtype=jnp.float32)

    # Excitation MLP (tiny; hidden under the DMA pipeline).
    s1 = jnp.dot(pooled, w1t_ref[...], preferred_element_type=jnp.float32)
    alpha = alpha_ref[0]
    s1 = jnp.where(s1 >= 0.0, s1, alpha * s1)            # PReLU (shared slope)
    s2 = jnp.dot(s1, w2t_ref[...], preferred_element_type=jnp.float32)
    scale = jax.nn.sigmoid(s2)                            # (B, C) f32

    # Gate: re-read x_ref (nothing big stays live across the MLP), multiply
    # in f32 and cast once on the store.
    o_ref[...] = (x_ref[...].astype(jnp.float32)
                  * scale[:, :, None]).astype(o_ref.dtype)


def _se_pool_kernel(x_ref, pooled_ref):
    """Chunked fallback, pass 1: accumulate the spatial sum over HW chunks.

    x_ref:      (B_TILE, C, HW_CHUNK)
    pooled_ref: (1, B_TILE, C) f32 accumulator (same block across the hw axis)
    """
    @pl.when(pl.program_id(1) == 0)
    def _():
        pooled_ref[...] = jnp.zeros_like(pooled_ref)
    pooled_ref[...] += jnp.sum(x_ref[...], axis=-1, dtype=jnp.float32)[None]


def _se_gate_kernel(scale_ref, x_ref, o_ref):
    """Chunked fallback, pass 2: apply the per-channel gate to an HW chunk.

    scale_ref: (1, B_TILE, C) f32 sigmoid gate
    x_ref:     (B_TILE, C, HW_CHUNK)
    o_ref:     (B_TILE, C, HW_CHUNK)
    """
    o_ref[...] = (x_ref[...].astype(jnp.float32)
                  * scale_ref[0][:, :, None]).astype(o_ref.dtype)


# ---------------------------------------------------------------------------
# Host-side tuning helpers
# ---------------------------------------------------------------------------

def _vmem_budget_bytes():
    """Physical VMEM minus ~25% headroom for compiler scratch / spill."""
    cap = None
    try:
        cap = int(getattr(pltpu.get_tpu_info(), "vmem_capacity_bytes"))
    except Exception:
        cap = None
    if not cap or cap <= 0:
        cap = 64 << 20          # conservative fallback (v7x-sized VMEM)
    return max(16 << 20, (cap * 3) // 4)      # e.g. 48 MiB on v7x, 96 MiB on v5e/v6e


def _is_multi_tc_chip():
    """True for chips with >1 TensorCore per device (v7x)."""
    try:
        kind = jax.devices()[0].device_kind.lower()
    except Exception:
        return False
    return ("v7" in kind) or ("7x" in kind)


def _pick_batch_tile(n, bytes_per_sample, target_bytes, multi_tc):
    """Largest divisor of n whose block is <= target_bytes.

    Only on multi-TC chips do we additionally keep grid >= 2 so both
    TensorCores get work; on single-TC v5e/v6e bigger blocks are strictly
    better (fewer per-step overheads on a mem-bound op).
    """
    max_bt = max(1, int(target_bytes) // max(1, bytes_per_sample))
    if multi_tc and n >= 2:
        max_bt = min(max_bt, max(1, n // 2))
    b_tile = 1
    for d in range(1, n + 1):
        if n % d == 0 and d <= max_bt:
            b_tile = d
    return b_tile


def _pick_hw_chunk(hw, c, itemsize, max_bytes):
    """Largest divisor of hw that is a multiple of 128 (lane-dense) and whose
    (C, chunk) slab stays under max_bytes.  None if no such divisor exists."""
    max_elems = max(1, int(max_bytes) // max(1, c * itemsize))
    best = None
    for d in range(128, hw + 1, 128):
        if hw % d == 0 and d <= max_elems:
            best = d
    return best


# ---------------------------------------------------------------------------
# Wrapper
# ---------------------------------------------------------------------------

def se_block(x, w1, w2, alpha, *, target_block_bytes=None,
             force_chunked=False, donate_input=False):
    """Squeeze-and-Excitation forward.

    x: (N, C, H, W); w1: (C//r, C); w2: (C, C//r); alpha: scalar-like PReLU slope.
    """
    N, C, H, W = x.shape
    Cr = w1.shape[0]
    HW = H * W

    # Native NCHW layout, spatial dims merged — a free reshape, no HBM pass.
    x3 = x.reshape(N, C, HW)

    # Tiny weights: cast once on the host, fold the 1/HW pool scale into w1t.
    w1t = jnp.transpose(w1).astype(jnp.float32) * (1.0 / HW)    # (C, Cr)
    w2t = jnp.transpose(w2).astype(jnp.float32)                 # (Cr, C)
    alpha1 = jnp.reshape(alpha, (1,)).astype(jnp.float32)       # SMEM scalar

    itemsize = jnp.dtype(x.dtype).itemsize
    bytes_per_sample = C * HW * itemsize

    multi_tc = _is_multi_tc_chip()
    vmem_budget = _vmem_budget_bytes()
    if target_block_bytes is None:
        # Deeper/larger blocks on v7x (3.2 TB/s HBM makes per-step overhead
        # relatively expensive); ~2 MiB already sits on the roofline plateau
        # for v5e/v6e.
        target_block_bytes = (6 << 20) if multi_tc else (2 << 20)
    target_block_bytes = min(int(target_block_bytes), vmem_budget // 6)

    # ---- chunked two-phase fallback: single sample slab does not fit VMEM --
    use_chunked = force_chunked or (6 * bytes_per_sample > vmem_budget)
    hw_chunk = None
    if use_chunked:
        hw_chunk = _pick_hw_chunk(HW, C, itemsize, target_block_bytes)
        if hw_chunk is None:
            # TODO(synk): HW has no lane-dense divisor; fall back to the fused
            # path with the full slab (may exceed the target VMEM budget).
            use_chunked = False

    if use_chunked:
        b_tile = _pick_batch_tile(N, C * hw_chunk * itemsize,
                                  target_block_bytes, multi_tc)
        nb, nhw = N // b_tile, HW // hw_chunk

        # Pass 1: pooled sum per (batch block, channel), accumulated over HW.
        pooled = pl.pallas_call(
            _se_pool_kernel,
            out_shape=jax.ShapeDtypeStruct((nb, b_tile, C), jnp.float32),
            grid_spec=pltpu.PrefetchScalarGridSpec(
                num_scalar_prefetch=0,
                grid=(nb, nhw),
                in_specs=[pl.BlockSpec((b_tile, C, hw_chunk),
                                       lambda b, h: (b, 0, h))],
                out_specs=pl.BlockSpec((1, b_tile, C), lambda b, h: (b, 0, 0)),
            ),
            compiler_params=pltpu.CompilerParams(
                dimension_semantics=("parallel", "arbitrary"),
                vmem_limit_bytes=vmem_budget),
        )(x3)

        # Tiny excitation MLP on the (N, C) pooled vector; negligible traffic,
        # so plain JAX is fine in this fallback path (the fused path below
        # keeps it inside the kernel).
        pooled2 = pooled.reshape(N, C)
        alpha_s = jnp.reshape(alpha, ()).astype(jnp.float32)
        s1 = pooled2 @ w1t
        s1 = jnp.where(s1 >= 0.0, s1, alpha_s * s1)
        scale = jax.nn.sigmoid(s1 @ w2t)                         # (N, C) f32
        scale3 = scale.reshape(nb, b_tile, C)

        # Pass 2: stream HW chunks again and apply the per-channel gate.
        out = pl.pallas_call(
            _se_gate_kernel,
            out_shape=jax.ShapeDtypeStruct((N, C, HW), x.dtype),
            grid_spec=pltpu.PrefetchScalarGridSpec(
                num_scalar_prefetch=0,
                grid=(nb, nhw),
                in_specs=[pl.BlockSpec((1, b_tile, C), lambda b, h: (b, 0, 0)),
                          pl.BlockSpec((b_tile, C, hw_chunk),
                                       lambda b, h: (b, 0, h))],
                out_specs=pl.BlockSpec((b_tile, C, hw_chunk),
                                       lambda b, h: (b, 0, h)),
            ),
            input_output_aliases=({1: 0} if donate_input else {}),
            compiler_params=pltpu.CompilerParams(
                dimension_semantics=("parallel", "parallel"),
                vmem_limit_bytes=vmem_budget),
        )(scale3, x3)
        return out.reshape(N, C, H, W)

    # ---- fused single-pass path (default): 1 read + 1 write of x -----------
    b_tile = _pick_batch_tile(N, bytes_per_sample, target_block_bytes, multi_tc)
    grid = (N // b_tile,)

    out = pl.pallas_call(
        _se_fused_kernel,
        out_shape=jax.ShapeDtypeStruct((N, C, HW), x.dtype),
        grid_spec=pltpu.PrefetchScalarGridSpec(
            num_scalar_prefetch=0,
            grid=grid,
            in_specs=[
                pl.BlockSpec((b_tile, C, HW), lambda b: (b, 0, 0)),
                pl.BlockSpec((C, Cr), lambda b: (0, 0)),
                pl.BlockSpec((Cr, C), lambda b: (0, 0)),
                pl.BlockSpec(memory_space=pltpu.MemorySpace.SMEM),
            ],
            out_specs=pl.BlockSpec((b_tile, C, HW), lambda b: (b, 0, 0)),
        ),
        input_output_aliases=({0: 0} if donate_input else {}),
        compiler_params=pltpu.CompilerParams(
            dimension_semantics=("parallel",),
            vmem_limit_bytes=vmem_budget),
    )(x3, w1t, w2t, alpha1)

    return out.reshape(N, C, H, W)


def se_block_ref(x, w1, w2, alpha):
    """Pure-JAX reference mirroring the PyTorch forward (NCHW)."""
    pooled = jnp.mean(x, axis=(2, 3), keepdims=True)              # (N,C,1,1)
    s1 = jnp.einsum('oc,ncij->noij', w1, pooled)                  # (N,Cr,1,1)
    s1 = jnp.where(s1 >= 0.0, s1, jnp.reshape(alpha, ())[None] * s1)
    s2 = jnp.einsum('oc,ncij->noij', w2, s1)                      # (N,C,1,1)
    return x * jax.nn.sigmoid(s2)


if __name__ == "__main__":
    key = jax.random.PRNGKey(0)
    N, C, H, W = 4, 128, 16, 16
    reduction = 16
    Cr = C // reduction

    kx, k1, k2 = jax.random.split(key, 3)
    x = jax.random.normal(kx, (N, C, H, W), dtype=jnp.float32)
    # 1x1 conv weights (no bias) and PReLU slope (0.25 = PyTorch default init).
    w1 = jax.random.normal(k1, (Cr, C), dtype=jnp.float32) * 0.1
    w2 = jax.random.normal(k2, (C, Cr), dtype=jnp.float32) * 0.1
    alpha = jnp.full((1,), 0.25, dtype=jnp.float32)

    ref = se_block_ref(x, w1, w2, alpha)

    # Default fused single-pass path.
    out = jax.block_until_ready(se_block(x, w1, w2, alpha))
    assert out.shape == (N, C, H, W)
    assert jnp.allclose(out, ref, atol=2e-5, rtol=2e-5)

    # Exercise the HW-chunked two-phase fallback (small blocks force 2 chunks).
    out_chunked = jax.block_until_ready(
        se_block(x, w1, w2, alpha, force_chunked=True,
                 target_block_bytes=64 << 10))
    assert jnp.allclose(out_chunked, ref, atol=2e-5, rtol=2e-5)

    print("KERNEL_OK")
</pallas_src>

<mosaic_0001>
module attributes {stable_mosaic.version = 11 : i64} {
  func.func @_se_fused_kernel(%arg0: i32, %arg1: memref<4x128x256xf32, #tpu.memory_space<vmem>>, %arg2: memref<128x8xf32, #tpu.memory_space<vmem>>, %arg3: memref<8x128xf32, #tpu.memory_space<vmem>>, %arg4: memref<1xf32, #tpu.memory_space<smem>>, %arg5: memref<4x128x256xf32, #tpu.memory_space<vmem>>) attributes {dimension_semantics = [#tpu.dimension_semantics<parallel>], iteration_bounds = array<i64: 1>, scalar_prefetch = 0 : i64, scratch_operands = 0 : i64, tpu.core_type = #tpu.core_type<tc>, window_params = [{transform_indices = @transform_0, window_bounds = array<i64: 4, 128, 256>}, {pipeline_mode = #tpu.pipeline_mode<synchronous>, transform_indices = @transform_1, window_bounds = array<i64: 128, 8>}, {pipeline_mode = #tpu.pipeline_mode<synchronous>, transform_indices = @transform_2, window_bounds = array<i64: 8, 128>}, {transform_indices = @transform_3, window_bounds = array<i64: 1>}, {transform_indices = @transform_4, window_bounds = array<i64: 4, 128, 256>}]} {
    %c0 = arith.constant 0 : index
    %c0_0 = arith.constant 0 : index
    %c0_1 = arith.constant 0 : index
    %0 = vector.load %arg1[%c0, %c0_0, %c0_1] : memref<4x128x256xf32, #tpu.memory_space<vmem>>, vector<4x128x256xf32>
    %cst = arith.constant dense<0.000000e+00> : vector<4x128xf32>
    %1 = vector.multi_reduction <add>, %0, %cst [2] : vector<4x128x256xf32> to vector<4x128xf32>
    %c0_2 = arith.constant 0 : index
    %c0_3 = arith.constant 0 : index
    %2 = vector.load %arg2[%c0_2, %c0_3] : memref<128x8xf32, #tpu.memory_space<vmem>>, vector<128x8xf32>
    %cst_4 = arith.constant dense<0.000000e+00> : vector<4x8xf32>
    %3 = tpu.matmul %1, %2, %cst_4 {dimension_numbers = #tpu.dot_dimension_numbers<[1], [0], [0], [1], [0, 0, 1, 1], [], []>} : vector<4x128xf32>, vector<128x8xf32>, vector<4x8xf32> -> vector<4x8xf32>
    %c0_5 = arith.constant 0 : index
    %4 = memref.load %arg4[%c0_5] : memref<1xf32, #tpu.memory_space<smem>>
    %cst_6 = arith.constant 0.000000e+00 : f32
    %5 = vector.broadcast %cst_6 : f32 to vector<4x8xf32>
    %6 = arith.cmpf oge, %3, %5 : vector<4x8xf32>
    %7 = vector.broadcast %4 : f32 to vector<4x8xf32>
    %8 = arith.mulf %7, %3 : vector<4x8xf32>
    %9 = arith.select %6, %3, %8 : vector<4x8xi1>, vector<4x8xf32>
    %c0_7 = arith.constant 0 : index
    %c0_8 = arith.constant 0 : index
    %10 = vector.load %arg3[%c0_7, %c0_8] : memref<8x128xf32, #tpu.memory_space<vmem>>, vector<8x128xf32>
    %cst_9 = arith.constant dense<0.000000e+00> : vector<4x128xf32>
    %11 = tpu.matmul %9, %10, %cst_9 {dimension_numbers = #tpu.dot_dimension_numbers<[1], [0], [0], [1], [0, 0, 1, 1], [], []>} : vector<4x8xf32>, vector<8x128xf32>, vector<4x128xf32> -> vector<4x128xf32>
    %12 = arith.negf %11 : vector<4x128xf32>
    %13 = math.exp %12 : vector<4x128xf32>
    %cst_10 = arith.constant 1.000000e+00 : f32
    %14 = vector.broadcast %cst_10 : f32 to vector<4x128xf32>
    %15 = arith.addf %14, %13 : vector<4x128xf32>
    %16 = arith.divf %14, %15 : vector<4x128xf32>
    %c0_11 = arith.constant 0 : index
    %c0_12 = arith.constant 0 : index
    %c0_13 = arith.constant 0 : index
    %17 = vector.load %arg1[%c0_11, %c0_12, %c0_13] : memref<4x128x256xf32, #tpu.memory_space<vmem>>, vector<4x128x256xf32>
    %18 = vector.shape_cast %16 : vector<4x128xf32> to vector<4x128x1xf32>
    %19 = vector.broadcast %18 : vector<4x128x1xf32> to vector<4x128x256xf32>
    %20 = arith.mulf %17, %19 : vector<4x128x256xf32>
    %c0_14 = arith.constant 0 : index
    %c0_15 = arith.constant 0 : index
    %c0_16 = arith.constant 0 : index
    %21 = vector.load %arg5[%c0_14, %c0_15, %c0_16] : memref<4x128x256xf32, #tpu.memory_space<vmem>>, vector<4x128x256xf32>
    tpu.vector_store %arg5[%c0_14, %c0_15, %c0_16], %20 {strides = array<i32>} : memref<4x128x256xf32, #tpu.memory_space<vmem>>, vector<4x128x256xf32>,
    return
  }
  func.func @transform_0(%arg0: i32) -> (i32, i32, i32) {
    %c0_i32 = arith.constant 0 : i32
    %c0_i32_0 = arith.constant 0 : i32
    %c0_i32_1 = arith.constant 0 : i32
    return %arg0, %c0_i32, %c0_i32_0 : i32, i32, i32
  }
  func.func @transform_1(%arg0: i32) -> (i32, i32) {
    %c0_i32 = arith.constant 0 : i32
    %c0_i32_0 = arith.constant 0 : i32
    %c0_i32_1 = arith.constant 0 : i32
    return %c0_i32, %c0_i32_0 : i32, i32
  }
  func.func @transform_2(%arg0: i32) -> (i32, i32) {
    %c0_i32 = arith.constant 0 : i32
    %c0_i32_0 = arith.constant 0 : i32
    %c0_i32_1 = arith.constant 0 : i32
    return %c0_i32, %c0_i32_0 : i32, i32
  }
  func.func @transform_3(%arg0: i32) -> i32 {
    %c0_i32 = arith.constant 0 : i32
    %c0_i32_0 = arith.constant 0 : i32
    return %c0_i32 : i32
  }
  func.func @transform_4(%arg0: i32) -> (i32, i32, i32) {
    %c0_i32 = arith.constant 0 : i32
    %c0_i32_0 = arith.constant 0 : i32
    %c0_i32_1 = arith.constant 0 : i32
    return %arg0, %c0_i32, %c0_i32_0 : i32, i32, i32
  }
}

</mosaic_0001>

<llo_original>
// kernel: tpu_custom_call.1
$region0: #{tpu_custom_call.1}
  #allocation0 [shape = 'u32[]', space=smem, size = 0x4, offset = 0x4, fixed_abs, tag = 'smem constant byte address 0x4 - core index']
  #allocation1 [shape = 'u32[144,128]{1,0:T(1,128)}', space=vmem, size = 0x12000, scoped, tag = 'internal scratch']
  #allocation2 [shape = 'f32[1]{0:T(128)S(6)}', space=smem, size = 0x200, scoped, tag = 'scoped memory for tpu_custom_call.1']
  %s0 = inlined_call_operand.hbm [shape: f32[4,128,256], index: 0, kind: input, shape index: {}]
  %s1 = inlined_call_operand.vmem [shape: f32[128,8], index: 1, kind: input, shape index: {}]
  %s2 = inlined_call_operand.vmem [shape: f32[8,128], index: 2, kind: input, shape index: {}]
  %s3 = inlined_call_operand.<no memory space> [shape: f32[1], index: 3, kind: input, shape index: {}]
  %s4 = inlined_call_operand.hbm [shape: f32[4,128,256], index: 4, kind: output, shape index: {}]
  %s5 = sld [smem:[#allocation0]]
  $region30: #{tpu_custom_call.1} parent=0
    _
  %s7 = ssub.s32 1, %s5
  %s8 = scalar_select 0, %s7, %s5
  %9 = sst [smem:[#allocation2]] %s3
  $region1: #{tpu_custom_call.1} parent=0
    #allocation3 [shape = 'u8[524288]{0}', space=vmem, size = 0x80000, scoped, tag = 'input window, operand 0, single buffered']
    #allocation4 [shape = 's32[1]{0}', space=sflag, size = 0x4, scoped, tag = 'scoped memory for tpu_custom_call.1']
    #allocation5 [shape = 's32[1]{0}', space=sflag, size = 0x4, scoped, tag = 'scoped memory for tpu_custom_call.1']
    #allocation6 [shape = 'u8[524288]{0}', space=vmem, size = 0x80000, scoped, tag = 'output window, operand 0, single buffered']
    %10 = vsyncpa [#allocation4], 0
    %11 = vsyncpa [#allocation5], 0
    // Predicated region
    $region2: #{tpu_custom_call.1} parent=1 // pred_check
      _
    $region3: #{tpu_custom_call.1} parent=1 // pred_check_branch
      %13 = sbr.rel (0) target = $region5
    $region4: #{tpu_custom_call.1} parent=1 // pred_region
      %s15 = ssub.s32 16384, 16384
      %16 = vsyncadd [#allocation4], %s15
      %s17 = sshll.u32 [#allocation3], 4
      %s18 = int_to_ptr.vmem [resolvable:$true] %s17
      %23 = dma.hbm_to_vmem [thread:$0]  %s0, 16384, %s18, [#allocation4], 256, 256, 16
    $region5: #{tpu_custom_call.1} parent=1 // pred_fallthru
      _
    // Predicated region
    $region6: #{tpu_custom_call.1} parent=1 // pred_check
      _
    $region7: #{tpu_custom_call.1} parent=1 // pred_check_branch
      %25 = sbr.rel (0) target = $region9
    $region8: #{tpu_custom_call.1} parent=1 // pred_region
      _
    $region9: #{tpu_custom_call.1} parent=1 // pred_fallthru
      _
    // Predicated region
    $region10: #{tpu_custom_call.1} parent=1 // pred_check
      _
    $region11: #{tpu_custom_call.1} parent=1 // pred_check_branch
      %27 = sbr.rel (0) target = $region13
    $region12: #{tpu_custom_call.1} parent=1 // pred_region
      _
    $region13: #{tpu_custom_call.1} parent=1 // pred_fallthru
      _
    // Predicated region
    $region14: #{tpu_custom_call.1} parent=1 // pred_check
      _
    $region15: #{tpu_custom_call.1} parent=1 // pred_check_branch
      %29 = sbr.rel (0) target = $region17
    $region16: #{tpu_custom_call.1} parent=1 // pred_region
      _
    $region17: #{tpu_custom_call.1} parent=1 // pred_fallthru
      _
    // Predicated region
    $region18: #{tpu_custom_call.1} parent=1 // pred_check
      _
    $region19: #{tpu_custom_call.1} parent=1 // pred_check_branch
      %31 = sbr.rel (0) target = $region21
    $region20: #{tpu_custom_call.1} parent=1 // pred_region
      %32 = dma.done [#allocation4], 16384
    $region21: #{tpu_custom_call.1} parent=1 // pred_fallthru
      _
    %v33 = vld [vmem:[#allocation3] sm:$0xff]
    %v34 = vld [vmem:[#allocation3 + $0x8] sm:$0xff]
    %v35 = vld [vmem:[#allocation3 + $0x10] sm:$0xff]
    %v36 = vld [vmem:[#allocation3 + $0x18] sm:$0xff]
    %v37 = vld [vmem:[#allocation3 + $0x20] sm:$0xff]
    %v38 = vld [vmem:[#allocation3 + $0x28] sm:$0xff]
    %v39 = vld [vmem:[#allocation3 + $0x30] sm:$0xff]
    %v40 = vld [vmem:[#allocation3 + $0x38] sm:$0xff]
    %v41 = vld [vmem:[#allocation3 + $0x40] sm:$0xff]
    %v42 = vld [vmem:[#allocation3 + $0x48] sm:$0xff]
    %v43 = vld [vmem:[#allocation3 + $0x50] sm:$0xff]
    %v44 = vld [vmem:[#allocation3 + $0x58] sm:$0xff]
    %v45 = vld [vmem:[#allocation3 + $0x60] sm:$0xff]
    %v46 = vld [vmem:[#allocation3 + $0x68] sm:$0xff]
    %v47 = vld [vmem:[#allocation3 + $0x70] sm:$0xff]
    %v48 = vld [vmem:[#allocation3 + $0x78] sm:$0xff]
    %v49 = vld [vmem:[#allocation3 + $0x80] sm:$0xff]
    %v50 = vld [vmem:[#allocation3 + $0x88] sm:$0xff]
    %v51 = vld [vmem:[#allocation3 + $0x90] sm:$0xff]
    %v52 = vld [vmem:[#allocation3 + $0x98] sm:$0xff]
    %v53 = vld [vmem:[#allocation3 + $0xa0] sm:$0xff]
    %v54 = vld [vmem:[#allocation3 + $0xa8] sm:$0xff]
    %v55 = vld [vmem:[#allocation3 + $0xb0] sm:$0xff]
    %v56 = vld [vmem:[#allocation3 + $0xb8] sm:$0xff]
    %v57 = vld [vmem:[#allocation3 + $0xc0] sm:$0xff]
    %v58 = vld [vmem:[#allocation3 + $0xc8] sm:$0xff]
    %v59 = vld [vmem:[#allocation3 + $0xd0] sm:$0xff]
    %v60 = vld [vmem:[#allocation3 + $0xd8] sm:$0xff]
    %v61 = vld [vmem:[#allocation3 + $0xe0] sm:$0xff]
    %v62 = vld [vmem:[#allocation3 + $0xe8] sm:$0xff]
    %v63 = vld [vmem:[#allocation3 + $0xf0] sm:$0xff]
    %v64 = vld [vmem:[#allocation3 + $0xf8] sm:$0xff]
    %v65 = vld [vmem:[#allocation3 + $0x100] sm:$0xff]
    %v66 = vld [vmem:[#allocation3 + $0x108] sm:$0xff]
    %v67 = vld [vmem:[#allocation3 + $0x110] sm:$0xff]
    %v68 = vld [vmem:[#allocation3 + $0x118] sm:$0xff]
    %v69 = vld [vmem:[#allocation3 + $0x120] sm:$0xff]
    %v70 = vld [vmem:[#allocation3 + $0x128] sm:$0xff]
    %v71 = vld [vmem:[#allocation3 + $0x130] sm:$0xff]
    %v72 = vld [vmem:[#allocation3 + $0x138] sm:$0xff]
    %v73 = vld [vmem:[#allocation3 + $0x140] sm:$0xff]
    %v74 = vld [vmem:[#allocation3 + $0x148] sm:$0xff]
    %v75 = vld [vmem:[#allocation3 + $0x150] sm:$0xff]
    %v76 = vld [vmem:[#allocation3 + $0x158] sm:$0xff]
    %v77 = vld [vmem:[#allocation3 + $0x160] sm:$0xff]
    %v78 = vld [vmem:[#allocation3 + $0x168] sm:$0xff]
    %v79 = vld [vmem:[#allocation3 + $0x170] sm:$0xff]
    %v80 = vld [vmem:[#allocation3 + $0x178] sm:$0xff]
    %v81 = vld [vmem:[#allocation3 + $0x180] sm:$0xff]
    %v82 = vld [vmem:[#allocation3 + $0x188] sm:$0xff]
    %v83 = vld [vmem:[#allocation3 + $0x190] sm:$0xff]
    %v84 = vld [vmem:[#allocation3 + $0x198] sm:$0xff]
    %v85 = vld [vmem:[#allocation3 + $0x1a0] sm:$0xff]
    %v86 = vld [vmem:[#allocation3 + $0x1a8] sm:$0xff]
    %v87 = vld [vmem:[#allocation3 + $0x1b0] sm:$0xff]
    %v88 = vld [vmem:[#allocation3 + $0x1b8] sm:$0xff]
    %v89 = vld [vmem:[#allocation3 + $0x1c0] sm:$0xff]
    %v90 = vld [vmem:[#allocation3 + $0x1c8] sm:$0xff]
    %v91 = vld [vmem:[#allocation3 + $0x1d0] sm:$0xff]
    %v92 = vld [vmem:[#allocation3 + $0x1d8] sm:$0xff]
    %v93 = vld [vmem:[#allocation3 + $0x1e0] sm:$0xff]
    %v94 = vld [vmem:[#allocation3 + $0x1e8] sm:$0xff]
    %v95 = vld [vmem:[#allocation3 + $0x1f0] sm:$0xff]
    %v96 = vld [vmem:[#allocation3 + $0x1f8] sm:$0xff]
    %v97 = vld [vmem:[#allocation3 + $0x200] sm:$0xff]
    %v98 = vld [vmem:[#allocation3 + $0x208] sm:$0xff]
    %v99 = vld [vmem:[#allocation3 + $0x210] sm:$0xff]
    %v100 = vld [vmem:[#allocation3 + $0x218] sm:$0xff]
    %v101 = vld [vmem:[#allocation3 + $0x220] sm:$0xff]
    %v102 = vld [vmem:[#allocation3 + $0x228] sm:$0xff]
    %v103 = vld [vmem:[#allocation3 + $0x230] sm:$0xff]
    %v104 = vld [vmem:[#allocation3 + $0x238] sm:$0xff]
    %v105 = vld [vmem:[#allocation3 + $0x240] sm:$0xff]
    %v106 = vld [vmem:[#allocation3 + $0x248] sm:$0xff]
    %v107 = vld [vmem:[#allocation3 + $0x250] sm:$0xff]
    %v108 = vld [vmem:[#allocation3 + $0x258] sm:$0xff]
    %v109 = vld [vmem:[#allocation3 + $0x260] sm:$0xff]
    %v110 = vld [vmem:[#allocation3 + $0x268] sm:$0xff]
    %v111 = vld [vmem:[#allocation3 + $0x270] sm:$0xff]
    %v112 = vld [vmem:[#allocation3 + $0x278] sm:$0xff]
    %v113 = vld [vmem:[#allocation3 + $0x280] sm:$0xff]
    %v114 = vld [vmem:[#allocation3 + $0x288] sm:$0xff]
    %v115 = vld [vmem:[#allocation3 + $0x290] sm:$0xff]
    %v116 = vld [vmem:[#allocation3 + $0x298] sm:$0xff]
    %v117 = vld [vmem:[#allocation3 + $0x2a0] sm:$0xff]
    %v118 = vld [vmem:[#allocation3 + $0x2a8] sm:$0xff]
    %v119 = vld [vmem:[#allocation3 + $0x2b0] sm:$0xff]
    %v120 = vld [vmem:[#allocation3 + $0x2b8] sm:$0xff]
    %v121 = vld [vmem:[#allocation3 + $0x2c0] sm:$0xff]
    %v122 = vld [vmem:[#allocation3 + $0x2c8] sm:$0xff]
    %v123 = vld [vmem:[#allocation3 + $0x2d0] sm:$0xff]
    %v124 = vld [vmem:[#allocation3 + $0x2d8] sm:$0xff]
    %v125 = vld [vmem:[#allocation3 + $0x2e0] sm:$0xff]
    %v126 = vld [vmem:[#allocation3 + $0x2e8] sm:$0xff]
    %v127 = vld [vmem:[#allocation3 + $0x2f0] sm:$0xff]
    %v128 = vld [vmem:[#allocation3 + $0x2f8] sm:$0xff]
    %v129 = vld [vmem:[#allocation3 + $0x300] sm:$0xff]
    %v130 = vld [vmem:[#allocation3 + $0x308] sm:$0xff]
    %v131 = vld [vmem:[#allocation3 + $0x310] sm:$0xff]
    %v132 = vld [vmem:[#allocation3 + $0x318] sm:$0xff]
    %v133 = vld [vmem:[#allocation3 + $0x320] sm:$0xff]
    %v134 = vld [vmem:[#allocation3 + $0x328] sm:$0xff]
    %v135 = vld [vmem:[#allocation3 + $0x330] sm:$0xff]
    %v136 = vld [vmem:[#allocation3 + $0x338] sm:$0xff]
    %v137 = vld [vmem:[#allocation3 + $0x340] sm:$0xff]
    %v138 = vld [vmem:[#allocation3 + $0x348] sm:$0xff]
    %v139 = vld [vmem:[#allocation3 + $0x350] sm:$0xff]
    %v140 = vld [vmem:[#allocation3 + $0x358] sm:$0xff]
    %v141 = vld [vmem:[#allocation3 + $0x360] sm:$0xff]
    %v142 = vld [vmem:[#allocation3 + $0x368] sm:$0xff]
    %v143 = vld [vmem:[#allocation3 + $0x370] sm:$0xff]
    %v144 = vld [vmem:[#allocation3 + $0x378] sm:$0xff]
    %v145 = vld [vmem:[#allocation3 + $0x380] sm:$0xff]
    %v146 = vld [vmem:[#allocation3 + $0x388] sm:$0xff]
    %v147 = vld [vmem:[#allocation3 + $0x390] sm:$0xff]
    %v148 = vld [vmem:[#allocation3 + $0x398] sm:$0xff]
    %v149 = vld [vmem:[#allocation3 + $0x3a0] sm:$0xff]
    %v150 = vld [vmem:[#allocation3 + $0x3a8] sm:$0xff]
    %v151 = vld [vmem:[#allocation3 + $0x3b0] sm:$0xff]
    %v152 = vld [vmem:[#allocation3 + $0x3b8] sm:$0xff]
    %v153 = vld [vmem:[#allocation3 + $0x3c0] sm:$0xff]
    %v154 = vld [vmem:[#allocation3 + $0x3c8] sm:$0xff]
    %v155 = vld [vmem:[#allocation3 + $0x3d0] sm:$0xff]
    %v156 = vld [vmem:[#allocation3 + $0x3d8] sm:$0xff]
    %v157 = vld [vmem:[#allocation3 + $0x3e0] sm:$0xff]
    %v158 = vld [vmem:[#allocation3 + $0x3e8] sm:$0xff]
    %v159 = vld [vmem:[#allocation3 + $0x3f0] sm:$0xff]
    %v160 = vld [vmem:[#allocation3 + $0x3f8] sm:$0xff]
    %v161 = vadd.f32 %v33, %v34
    %162 = vadd.xlane.f32.xlu0 %v161
    %v163 = vpop.xlane.xlu0 %162
    %v164 = vadd.f32 %v35, %v36
    %165 = vadd.xlane.f32.xlu0 %v164
    %v166 = vpop.xlane.xlu0 %165
    %v167 = vadd.f32 %v37, %v38
    %168 = vadd.xlane.f32.xlu0 %v167
    %v169 = vpop.xlane.xlu0 %168
    %v170 = vadd.f32 %v39, %v40
    %171 = vadd.xlane.f32.xlu0 %v170
    %v172 = vpop.xlane.xlu0 %171
    %v173 = vadd.f32 %v41, %v42
    %174 = vadd.xlane.f32.xlu0 %v173
    %v175 = vpop.xlane.xlu0 %174
    %v176 = vadd.f32 %v43, %v44
    %177 = vadd.xlane.f32.xlu0 %v176
    %v178 = vpop.xlane.xlu0 %177
    %v179 = vadd.f32 %v45, %v46
    %180 = vadd.xlane.f32.xlu0 %v179
    %v181 = vpop.xlane.xlu0 %180
    %v182 = vadd.f32 %v47, %v48
    %183 = vadd.xlane.f32.xlu0 %v182
    %v184 = vpop.xlane.xlu0 %183
    %v185 = vadd.f32 %v49, %v50
    %186 = vadd.xlane.f32.xlu0 %v185
    %v187 = vpop.xlane.xlu0 %186
    %v188 = vadd.f32 %v51, %v52
    %189 = vadd.xlane.f32.xlu0 %v188
    %v190 = vpop.xlane.xlu0 %189
    %v191 = vadd.f32 %v53, %v54
    %192 = vadd.xlane.f32.xlu0 %v191
    %v193 = vpop.xlane.xlu0 %192
    %v194 = vadd.f32 %v55, %v56
    %195 = vadd.xlane.f32.xlu0 %v194
    %v196 = vpop.xlane.xlu0 %195
    %v197 = vadd.f32 %v57, %v58
    %198 = vadd.xlane.f32.xlu0 %v197
    %v199 = vpop.xlane.xlu0 %198
    %v200 = vadd.f32 %v59, %v60
    %201 = vadd.xlane.f32.xlu0 %v200
    %v202 = vpop.xlane.xlu0 %201
    %v203 = vadd.f32 %v61, %v62
    %204 = vadd.xlane.f32.xlu0 %v203
    %v205 = vpop.xlane.xlu0 %204
    %v206 = vadd.f32 %v63, %v64
    %207 = vadd.xlane.f32.xlu0 %v206
    %v208 = vpop.xlane.xlu0 %207
    %v209 = vadd.f32 %v65, %v66
    %210 = vadd.xlane.f32.xlu0 %v209
    %v211 = vpop.xlane.xlu0 %210
    %v212 = vadd.f32 %v67, %v68
    %213 = vadd.xlane.f32.xlu0 %v212
    %v214 = vpop.xlane.xlu0 %213
    %v215 = vadd.f32 %v69, %v70
    %216 = vadd.xlane.f32.xlu0 %v215
    %v217 = vpop.xlane.xlu0 %216
    %v218 = vadd.f32 %v71, %v72
    %219 = vadd.xlane.f32.xlu0 %v218
    %v220 = vpop.xlane.xlu0 %219
    %v221 = vadd.f32 %v73, %v74
    %222 = vadd.xlane.f32.xlu0 %v221
    %v223 = vpop.xlane.xlu0 %222
    %v224 = vadd.f32 %v75, %v76
    %225 = vadd.xlane.f32.xlu0 %v224
    %v226 = vpop.xlane.xlu0 %225
    %v227 = vadd.f32 %v77, %v78
    %228 = vadd.xlane.f32.xlu0 %v227
    %v229 = vpop.xlane.xlu0 %228
    %v230 = vadd.f32 %v79, %v80
    %231 = vadd.xlane.f32.xlu0 %v230
    %v232 = vpop.xlane.xlu0 %231
    %v233 = vadd.f32 %v81, %v82
    %234 = vadd.xlane.f32.xlu0 %v233
    %v235 = vpop.xlane.xlu0 %234
    %v236 = vadd.f32 %v83, %v84
    %237 = vadd.xlane.f32.xlu0 %v236
    %v238 = vpop.xlane.xlu0 %237
    %v239 = vadd.f32 %v85, %v86
    %240 = vadd.xlane.f32.xlu0 %v239
    %v241 = vpop.xlane.xlu0 %240
    %v242 = vadd.f32 %v87, %v88
    %243 = vadd.xlane.f32.xlu0 %v242
    %v244 = vpop.xlane.xlu0 %243
    %v245 = vadd.f32 %v89, %v90
    %246 = vadd.xlane.f32.xlu0 %v245
    %v247 = vpop.xlane.xlu0 %246
    %v248 = vadd.f32 %v91, %v92
    %249 = vadd.xlane.f32.xlu0 %v248
    %v250 = vpop.xlane.xlu0 %249
    %v251 = vadd.f32 %v93, %v94
    %252 = vadd.xlane.f32.xlu0 %v251
    %v253 = vpop.xlane.xlu0 %252
    %v254 = vadd.f32 %v95, %v96
    %255 = vadd.xlane.f32.xlu0 %v254
    %v256 = vpop.xlane.xlu0 %255
    %v257 = vadd.f32 %v97, %v98
    %258 = vadd.xlane.f32.xlu0 %v257
    %v259 = vpop.xlane.xlu0 %258
    %v260 = vadd.f32 %v99, %v100
    %261 = vadd.xlane.f32.xlu0 %v260
    %v262 = vpop.xlane.xlu0 %261
    %v263 = vadd.f32 %v101, %v102
    %264 = vadd.xlane.f32.xlu0 %v263
    %v265 = vpop.xlane.xlu0 %264
    %v266 = vadd.f32 %v103, %v104
    %267 = vadd.xlane.f32.xlu0 %v266
    %v268 = vpop.xlane.xlu0 %267
    %v269 = vadd.f32 %v105, %v106
    %270 = vadd.xlane.f32.xlu0 %v269
    %v271 = vpop.xlane.xlu0 %270
    %v272 = vadd.f32 %v107, %v108
    %273 = vadd.xlane.f32.xlu0 %v272
    %v274 = vpop.xlane.xlu0 %273
    %v275 = vadd.f32 %v109, %v110
    %276 = vadd.xlane.f32.xlu0 %v275
    %v277 = vpop.xlane.xlu0 %276
    %v278 = vadd.f32 %v111, %v112
    %279 = vadd.xlane.f32.xlu0 %v278
    %v280 = vpop.xlane.xlu0 %279
    %v281 = vadd.f32 %v113, %v114
    %282 = vadd.xlane.f32.xlu0 %v281
    %v283 = vpop.xlane.xlu0 %282
    %v284 = vadd.f32 %v115, %v116
    %285 = vadd.xlane.f32.xlu0 %v284
    %v286 = vpop.xlane.xlu0 %285
    %v287 = vadd.f32 %v117, %v118
    %288 = vadd.xlane.f32.xlu0 %v287
    %v289 = vpop.xlane.xlu0 %288
    %v290 = vadd.f32 %v119, %v120
    %291 = vadd.xlane.f32.xlu0 %v290
    %v292 = vpop.xlane.xlu0 %291
    %v293 = vadd.f32 %v121, %v122
    %294 = vadd.xlane.f32.xlu0 %v293
    %v295 = vpop.xlane.xlu0 %294
    %v296 = vadd.f32 %v123, %v124
    %297 = vadd.xlane.f32.xlu0 %v296
    %v298 = vpop.xlane.xlu0 %297
    %v299 = vadd.f32 %v125, %v126
    %300 = vadd.xlane.f32.xlu0 %v299
    %v301 = vpop.xlane.xlu0 %300
    %v302 = vadd.f32 %v127, %v128
    %303 = vadd.xlane.f32.xlu0 %v302
    %v304 = vpop.xlane.xlu0 %303
    %v305 = vadd.f32 %v129, %v130
    %306 = vadd.xlane.f32.xlu0 %v305
    %v307 = vpop.xlane.xlu0 %306
    %v308 = vadd.f32 %v131, %v132
    %309 = vadd.xlane.f32.xlu0 %v308
    %v310 = vpop.xlane.xlu0 %309
    %v311 = vadd.f32 %v133, %v134
    %312 = vadd.xlane.f32.xlu0 %v311
    %v313 = vpop.xlane.xlu0 %312
    %v314 = vadd.f32 %v135, %v136
    %315 = vadd.xlane.f32.xlu0 %v314
    %v316 = vpop.xlane.xlu0 %315
    %v317 = vadd.f32 %v137, %v138
    %318 = vadd.xlane.f32.xlu0 %v317
    %v319 = vpop.xlane.xlu0 %318
    %v320 = vadd.f32 %v139, %v140
    %321 = vadd.xlane.f32.xlu0 %v320
    %v322 = vpop.xlane.xlu0 %321
    %v323 = vadd.f32 %v141, %v142
    %324 = vadd.xlane.f32.xlu0 %v323
    %v325 = vpop.xlane.xlu0 %324
    %v326 = vadd.f32 %v143, %v144
    %327 = vadd.xlane.f32.xlu0 %v326
    %v328 = vpop.xlane.xlu0 %327
    %v329 = vadd.f32 %v145, %v146
    %330 = vadd.xlane.f32.xlu0 %v329
    %v331 = vpop.xlane.xlu0 %330
    %v332 = vadd.f32 %v147, %v148
    %333 = vadd.xlane.f32.xlu0 %v332
    %v334 = vpop.xlane.xlu0 %333
    %v335 = vadd.f32 %v149, %v150
    %336 = vadd.xlane.f32.xlu0 %v335
    %v337 = vpop.xlane.xlu0 %336
    %v338 = vadd.f32 %v151, %v152
    %339 = vadd.xlane.f32.xlu0 %v338
    %v340 = vpop.xlane.xlu0 %339
    %v341 = vadd.f32 %v153, %v154
    %342 = vadd.xlane.f32.xlu0 %v341
    %v343 = vpop.xlane.xlu0 %342
    %v344 = vadd.f32 %v155, %v156
    %345 = vadd.xlane.f32.xlu0 %v344
    %v346 = vpop.xlane.xlu0 %345
    %v347 = vadd.f32 %v157, %v158
    %348 = vadd.xlane.f32.xlu0 %v347
    %v349 = vpop.xlane.xlu0 %348
    %v350 = vadd.f32 %v159, %v160
    %351 = vadd.xlane.f32.xlu0 %v350
    %v352 = vpop.xlane.xlu0 %351
    %v353 = vld [vmem:[%s1] sm:$0xff]
    %v354 = vld [vmem:[%s1 + $0x8] sm:$0xff]
    %v355 = vld [vmem:[%s1 + $0x10] sm:$0xff]
    %v356 = vld [vmem:[%s1 + $0x18] sm:$0xff]
    %v357 = vld [vmem:[%s1 + $0x20] sm:$0xff]
    %v358 = vld [vmem:[%s1 + $0x28] sm:$0xff]
    %v359 = vld [vmem:[%s1 + $0x30] sm:$0xff]
    %v360 = vld [vmem:[%s1 + $0x38] sm:$0xff]
    %v361 = vld [vmem:[%s1 + $0x40] sm:$0xff]
    %v362 = vld [vmem:[%s1 + $0x48] sm:$0xff]
    %v363 = vld [vmem:[%s1 + $0x50] sm:$0xff]
    %v364 = vld [vmem:[%s1 + $0x58] sm:$0xff]
    %v365 = vld [vmem:[%s1 + $0x60] sm:$0xff]
    %v366 = vld [vmem:[%s1 + $0x68] sm:$0xff]
    %v367 = vld [vmem:[%s1 + $0x70] sm:$0xff]
    %v368 = vld [vmem:[%s1 + $0x78] sm:$0xff]
    %v433 = vlaneseq
    %v434 = vand.u32 %v433, 127
    %v435 = vlaneseq
    %v436 = vshrl.u32 %v435, 7
    %v437 = vsub.s32 %v434, %v436
    %v438 = vrot.slane %v163, %v437
    %v439 = vadd.s32 %v434, 4294967288
    %v440 = vlaneseq
    %v441 = vshrl.u32 %v440, 7
    %v442 = vsub.s32 %v439, %v441
    %v443 = vrot.slane %v166, %v442
    %vm444 = vcmask 130112
    %v445 = vsel %vm444, %v443, %v438
    %v446 = vadd.s32 %v434, 4294967280
    %v447 = vlaneseq
    %v448 = vshrl.u32 %v447, 7
    %v449 = vsub.s32 %v446, %v448
    %v450 = vrot.slane %v169, %v449
    %vm451 = vcmask 195712
    %v452 = vsel %vm451, %v450, %v445
    %v453 = vadd.s32 %v434, 4294967272
    %v454 = vlaneseq
    %v455 = vshrl.u32 %v454, 7
    %v456 = vsub.s32 %v453, %v455
    %v457 = vrot.slane %v172, %v456
    %vm458 = vcmask 261312
    %v459 = vsel %vm458, %v457, %v452
    %v460 = vadd.s32 %v434, 4294967264
    %v461 = vlaneseq
    %v462 = vshrl.u32 %v461, 7
    %v463 = vsub.s32 %v460, %v462
    %v464 = vrot.slane %v175, %v463
    %vm465 = vcmask 326912
    %v466 = vsel %vm465, %v464, %v459
    %v467 = vadd.s32 %v434, 4294967256
    %v468 = vlaneseq
    %v469 = vshrl.u32 %v468, 7
    %v470 = vsub.s32 %v467, %v469
    %v471 = vrot.slane %v178, %v470
    %vm472 = vcmask 392512
    %v473 = vsel %vm472, %v471, %v466
    %v474 = vadd.s32 %v434, 4294967248
    %v475 = vlaneseq
    %v476 = vshrl.u32 %v475, 7
    %v477 = vsub.s32 %v474, %v476
    %v478 = vrot.slane %v181, %v477
    %vm479 = vcmask 458112
    %v480 = vsel %vm479, %v478, %v473
    %v481 = vadd.s32 %v434, 4294967240
    %v482 = vlaneseq
    %v483 = vshrl.u32 %v482, 7
    %v484 = vsub.s32 %v481, %v483
    %v485 = vrot.slane %v184, %v484
    %vm486 = vcmask 523712
    %v487 = vsel %vm486, %v485, %v480
    %v488 = vadd.s32 %v434, 4294967232
    %v489 = vlaneseq
    %v490 = vshrl.u32 %v489, 7
    %v491 = vsub.s32 %v488, %v490
    %v492 = vrot.slane %v187, %v491
    %vm493 = vcmask 589312
    %v494 = vsel %vm493, %v492, %v487
    %v495 = vadd.s32 %v434, 4294967224
    %v496 = vlaneseq
    %v497 = vshrl.u32 %v496, 7
    %v498 = vsub.s32 %v495, %v497
    %v499 = vrot.slane %v190, %v498
    %vm500 = vcmask 654912
    %v501 = vsel %vm500, %v499, %v494
    %v502 = vadd.s32 %v434, 4294967216
    %v503 = vlaneseq
    %v504 = vshrl.u32 %v503, 7
    %v505 = vsub.s32 %v502, %v504
    %v506 = vrot.slane %v193, %v505
    %vm507 = vcmask 720512
    %v508 = vsel %vm507, %v506, %v501
    %v509 = vadd.s32 %v434, 4294967208
    %v510 = vlaneseq
    %v511 = vshrl.u32 %v510, 7
    %v512 = vsub.s32 %v509, %v511
    %v513 = vrot.slane %v196, %v512
    %vm514 = vcmask 786112
    %v515 = vsel %vm514, %v513, %v508
    %v516 = vadd.s32 %v434, 4294967200
    %v517 = vlaneseq
    %v518 = vshrl.u32 %v517, 7
    %v519 = vsub.s32 %v516, %v518
    %v520 = vrot.slane %v199, %v519
    %vm521 = vcmask 851712
    %v522 = vsel %vm521, %v520, %v515
    %v523 = vadd.s32 %v434, 4294967192
    %v524 = vlaneseq
    %v525 = vshrl.u32 %v524, 7
    %v526 = vsub.s32 %v523, %v525
    %v527 = vrot.slane %v202, %v526
    %vm528 = vcmask 917312
    %v529 = vsel %vm528, %v527, %v522
    %v530 = vadd.s32 %v434, 4294967184
    %v531 = vlaneseq
    %v532 = vshrl.u32 %v531, 7
    %v533 = vsub.s32 %v530, %v532
    %v534 = vrot.slane %v205, %v533
    %vm535 = vcmask 982912
    %v536 = vsel %vm535, %v534, %v529
    %v537 = vadd.s32 %v434, 4294967176
    %v538 = vlaneseq
    %v539 = vshrl.u32 %v538, 7
    %v540 = vsub.s32 %v537, %v539
    %v541 = vrot.slane %v208, %v540
    %vm542 = vcmask 1048512
    %v543 = vsel %vm542, %v541, %v536
    %v544 = vlaneseq
    %v545 = vshrl.u32 %v544, 7
    %v546 = vsub.s32 %v434, %v545
    %v547 = vrot.slane %v211, %v546
    %v548 = vlaneseq
    %v549 = vshrl.u32 %v548, 7
    %v550 = vsub.s32 %v439, %v549
    %v551 = vrot.slane %v214, %v550
    %v552 = vsel %vm444, %v551, %v547
    %v553 = vlaneseq
    %v554 = vshrl.u32 %v553, 7
    %v555 = vsub.s32 %v446, %v554
    %v556 = vrot.slane %v217, %v555
    %v557 = vsel %vm451, %v556, %v552
    %v558 = vlaneseq
    %v559 = vshrl.u32 %v558, 7
    %v560 = vsub.s32 %v453, %v559
    %v561 = vrot.slane %v220, %v560
    %v562 = vsel %vm458, %v561, %v557
    %v563 = vlaneseq
    %v564 = vshrl.u32 %v563, 7
    %v565 = vsub.s32 %v460, %v564
    %v566 = vrot.slane %v223, %v565
    %v567 = vsel %vm465, %v566, %v562
    %v568 = vlaneseq
    %v569 = vshrl.u32 %v568, 7
    %v570 = vsub.s32 %v467, %v569
    %v571 = vrot.slane %v226, %v570
    %v572 = vsel %vm472, %v571, %v567
    %v573 = vlaneseq
    %v574 = vshrl.u32 %v573, 7
    %v575 = vsub.s32 %v474, %v574
    %v576 = vrot.slane %v229, %v575
    %v577 = vsel %vm479, %v576, %v572
    %v578 = vlaneseq
    %v579 = vshrl.u32 %v578, 7
    %v580 = vsub.s32 %v481, %v579
    %v581 = vrot.slane %v232, %v580
    %v582 = vsel %vm486, %v581, %v577
    %v583 = vlaneseq
    %v584 = vshrl.u32 %v583, 7
    %v585 = vsub.s32 %v488, %v584
    %v586 = vrot.slane %v235, %v585
    %v587 = vsel %vm493, %v586, %v582
    %v588 = vlaneseq
    %v589 = vshrl.u32 %v588, 7
    %v590 = vsub.s32 %v495, %v589
    %v591 = vrot.slane %v238, %v590
    %v592 = vsel %vm500, %v591, %v587
    %v593 = vlaneseq
    %v594 = vshrl.u32 %v593, 7
    %v595 = vsub.s32 %v502, %v594
    %v596 = vrot.slane %v241, %v595
    %v597 = vsel %vm507, %v596, %v592
    %v598 = vlaneseq
    %v599 = vshrl.u32 %v598, 7
    %v600 = vsub.s32 %v509, %v599
    %v601 = vrot.slane %v244, %v600
    %v602 = vsel %vm514, %v601, %v597
    %v603 = vlaneseq
    %v604 = vshrl.u32 %v603, 7
    %v605 = vsub.s32 %v516, %v604
    %v606 = vrot.slane %v247, %v605
    %v607 = vsel %vm521, %v606, %v602
    %v608 = vlaneseq
    %v609 = vshrl.u32 %v608, 7
    %v610 = vsub.s32 %v523, %v609
    %v611 = vrot.slane %v250, %v610
    %v612 = vsel %vm528, %v611, %v607
    %v613 = vlaneseq
    %v614 = vshrl.u32 %v613, 7
    %v615 = vsub.s32 %v530, %v614
    %v616 = vrot.slane %v253, %v615
    %v617 = vsel %vm535, %v616, %v612
    %v618 = vlaneseq
    %v619 = vshrl.u32 %v618, 7
    %v620 = vsub.s32 %v537, %v619
    %v621 = vrot.slane %v256, %v620
    %v622 = vsel %vm542, %v621, %v617
    %v623 = vlaneseq
    %v624 = vshrl.u32 %v623, 7
    %v625 = vsub.s32 %v434, %v624
    %v626 = vrot.slane %v259, %v625
    %v627 = vlaneseq
    %v628 = vshrl.u32 %v627, 7
    %v629 = vsub.s32 %v439, %v628
    %v630 = vrot.slane %v262, %v629
    %v631 = vsel %vm444, %v630, %v626
    %v632 = vlaneseq
    %v633 = vshrl.u32 %v632, 7
    %v634 = vsub.s32 %v446, %v633
    %v635 = vrot.slane %v265, %v634
    %v636 = vsel %vm451, %v635, %v631
    %v637 = vlaneseq
    %v638 = vshrl.u32 %v637, 7
    %v639 = vsub.s32 %v453, %v638
    %v640 = vrot.slane %v268, %v639
    %v641 = vsel %vm458, %v640, %v636
    %v642 = vlaneseq
    %v643 = vshrl.u32 %v642, 7
    %v644 = vsub.s32 %v460, %v643
    %v645 = vrot.slane %v271, %v644
    %v646 = vsel %vm465, %v645, %v641
    %v647 = vlaneseq
    %v648 = vshrl.u32 %v647, 7
    %v649 = vsub.s32 %v467, %v648
    %v650 = vrot.slane %v274, %v649
    %v651 = vsel %vm472, %v650, %v646
    %v652 = vlaneseq
    %v653 = vshrl.u32 %v652, 7
    %v654 = vsub.s32 %v474, %v653
    %v655 = vrot.slane %v277, %v654
    %v656 = vsel %vm479, %v655, %v651
    %v657 = vlaneseq
    %v658 = vshrl.u32 %v657, 7
    %v659 = vsub.s32 %v481, %v658
    %v660 = vrot.slane %v280, %v659
    %v661 = vsel %vm486, %v660, %v656
    %v662 = vlaneseq
    %v663 = vshrl.u32 %v662, 7
    %v664 = vsub.s32 %v488, %v663
    %v665 = vrot.slane %v283, %v664
    %v666 = vsel %vm493, %v665, %v661
    %v667 = vlaneseq
    %v668 = vshrl.u32 %v667, 7
    %v669 = vsub.s32 %v495, %v668
    %v670 = vrot.slane %v286, %v669
    %v671 = vsel %vm500, %v670, %v666
    %v672 = vlaneseq
    %v673 = vshrl.u32 %v672, 7
    %v674 = vsub.s32 %v502, %v673
    %v675 = vrot.slane %v289, %v674
    %v676 = vsel %vm507, %v675, %v671
    %v677 = vlaneseq
    %v678 = vshrl.u32 %v677, 7
    %v679 = vsub.s32 %v509, %v678
    %v680 = vrot.slane %v292, %v679
    %v681 = vsel %vm514, %v680, %v676
    %v682 = vlaneseq
    %v683 = vshrl.u32 %v682, 7
    %v684 = vsub.s32 %v516, %v683
    %v685 = vrot.slane %v295, %v684
    %v686 = vsel %vm521, %v685, %v681
    %v687 = vlaneseq
    %v688 = vshrl.u32 %v687, 7
    %v689 = vsub.s32 %v523, %v688
    %v690 = vrot.slane %v298, %v689
    %v691 = vsel %vm528, %v690, %v686
    %v692 = vlaneseq
    %v693 = vshrl.u32 %v692, 7
    %v694 = vsub.s32 %v530, %v693
    %v695 = vrot.slane %v301, %v694
    %v696 = vsel %vm535, %v695, %v691
    %v697 = vlaneseq
    %v698 = vshrl.u32 %v697, 7
    %v699 = vsub.s32 %v537, %v698
    %v700 = vrot.slane %v304, %v699
    %v701 = vsel %vm542, %v700, %v696
    %v702 = vlaneseq
    %v703 = vshrl.u32 %v702, 7
    %v704 = vsub.s32 %v434, %v703
    %v705 = vrot.slane %v307, %v704
    %v706 = vlaneseq
    %v707 = vshrl.u32 %v706, 7
    %v708 = vsub.s32 %v439, %v707
    %v709 = vrot.slane %v310, %v708
    %v710 = vsel %vm444, %v709, %v705
    %v711 = vlaneseq
    %v712 = vshrl.u32 %v711, 7
    %v713 = vsub.s32 %v446, %v712
    %v714 = vrot.slane %v313, %v713
    %v715 = vsel %vm451, %v714, %v710
    %v716 = vlaneseq
    %v717 = vshrl.u32 %v716, 7
    %v718 = vsub.s32 %v453, %v717
    %v719 = vrot.slane %v316, %v718
    %v720 = vsel %vm458, %v719, %v715
    %v721 = vlaneseq
    %v722 = vshrl.u32 %v721, 7
    %v723 = vsub.s32 %v460, %v722
    %v724 = vrot.slane %v319, %v723
    %v725 = vsel %vm465, %v724, %v720
    %v726 = vlaneseq
    %v727 = vshrl.u32 %v726, 7
    %v728 = vsub.s32 %v467, %v727
    %v729 = vrot.slane %v322, %v728
    %v730 = vsel %vm472, %v729, %v725
    %v731 = vlaneseq
    %v732 = vshrl.u32 %v731, 7
    %v733 = vsub.s32 %v474, %v732
    %v734 = vrot.slane %v325, %v733
    %v735 = vsel %vm479, %v734, %v730
    %v736 = vlaneseq
    %v737 = vshrl.u32 %v736, 7
    %v738 = vsub.s32 %v481, %v737
    %v739 = vrot.slane %v328, %v738
    %v740 = vsel %vm486, %v739, %v735
    %v741 = vlaneseq
    %v742 = vshrl.u32 %v741, 7
    %v743 = vsub.s32 %v488, %v742
    %v744 = vrot.slane %v331, %v743
    %v745 = vsel %vm493, %v744, %v740
    %v746 = vlaneseq
    %v747 = vshrl.u32 %v746, 7
    %v748 = vsub.s32 %v495, %v747
    %v749 = vrot.slane %v334, %v748
    %v750 = vsel %vm500, %v749, %v745
    %v751 = vlaneseq
    %v752 = vshrl.u32 %v751, 7
    %v753 = vsub.s32 %v502, %v752
    %v754 = vrot.slane %v337, %v753
    %v755 = vsel %vm507, %v754, %v750
    %v756 = vlaneseq
    %v757 = vshrl.u32 %v756, 7
    %v758 = vsub.s32 %v509, %v757
    %v759 = vrot.slane %v340, %v758
    %v760 = vsel %vm514, %v759, %v755
    %v761 = vlaneseq
    %v762 = vshrl.u32 %v761, 7
    %v763 = vsub.s32 %v516, %v762
    %v764 = vrot.slane %v343, %v763
    %v765 = vsel %vm521, %v764, %v760
    %v766 = vlaneseq
    %v767 = vshrl.u32 %v766, 7
    %v768 = vsub.s32 %v523, %v767
    %v769 = vrot.slane %v346, %v768
    %v770 = vsel %vm528, %v769, %v765
    %v771 = vlaneseq
    %v772 = vshrl.u32 %v771, 7
    %v773 = vsub.s32 %v530, %v772
    %v774 = vrot.slane %v349, %v773
    %v775 = vsel %vm535, %v774, %v770
    %v776 = vlaneseq
    %v777 = vshrl.u32 %v776, 7
    %v778 = vsub.s32 %v537, %v777
    %v779 = vrot.slane %v352, %v778
    %v780 = vsel %vm542, %v779, %v775
    %vm781 = vcmask 1041409
    %v782 = vsel %vm781, %v622, %v543
    %vm783 = vcmask 1042434
    %v784 = vsel %vm783, %v701, %v782
    %vm785 = vcmask 1043459
    %v786 = vsel %vm785, %v780, %v784
    %788 = vmatprep.subr.mxu0 0.0
    %789 = vmatpush1.msra.mxu0 %v353
    %790 = vmatprep.subr.mxu0 0.0
    %791 = vmatpush1.msra.mxu0 %v354
    %792 = vmatprep.subr.mxu0 0.0
    %793 = vmatpush1.msra.mxu0 %v355
    %794 = vmatprep.subr.mxu0 0.0
    %795 = vmatpush1.msra.mxu0 %v356
    %796 = vmatprep.subr.mxu0 0.0
    %797 = vmatpush1.msra.mxu0 %v357
    %798 = vmatprep.subr.mxu0 0.0
    %799 = vmatpush1.msra.mxu0 %v358
    %800 = vmatprep.subr.mxu0 0.0
    %801 = vmatpush1.msra.mxu0 %v359
    %802 = vmatprep.subr.mxu0 0.0
    %803 = vmatpush1.msra.mxu0 %v360
    %804 = vmatprep.subr.mxu0 0.0
    %805 = vmatpush1.msra.mxu0 %v361
    %806 = vmatprep.subr.mxu0 0.0
    %807 = vmatpush1.msra.mxu0 %v362
    %808 = vmatprep.subr.mxu0 0.0
    %809 = vmatpush1.msra.mxu0 %v363
    %810 = vmatprep.subr.mxu0 0.0
    %811 = vmatpush1.msra.mxu0 %v364
    %812 = vmatprep.subr.mxu0 0.0
    %813 = vmatpush1.msra.mxu0 %v365
    %814 = vmatprep.subr.mxu0 0.0
    %815 = vmatpush1.msra.mxu0 %v366
    %816 = vmatprep.subr.mxu0 0.0
    %817 = vmatpush1.msra.mxu0 %v367
    %818 = vmatprep.subr.mxu0 0.0
    %819 = vmatpush1.msra.mxu0 %v368
    %820 = vmatprep.subr.mxu0 0.0
    %821 = vmatpush1.msra.mxu0 0.0
    %822 = vmatprep.subr.mxu0 0.0
    %823 = vmatpush1.msra.mxu0 0.0
    %824 = vmatprep.subr.mxu0 0.0
    %825 = vmatpush1.msra.mxu0 0.0
    %826 = vmatprep.subr.mxu0 0.0
    %827 = vmatpush1.msra.mxu0 0.0
    %828 = vmatprep.subr.mxu0 0.0
    %829 = vmatpush1.msra.mxu0 0.0
    %830 = vmatprep.subr.mxu0 0.0
    %831 = vmatpush1.msra.mxu0 0.0
    %832 = vmatprep.subr.mxu0 0.0
    %833 = vmatpush1.msra.mxu0 0.0
    %834 = vmatprep.subr.mxu0 0.0
    %835 = vmatpush1.msra.mxu0 0.0
    %836 = vmatprep.subr.mxu0 0.0
    %837 = vmatpush1.msra.mxu0 0.0
    %838 = vmatprep.subr.mxu0 0.0
    %839 = vmatpush1.msra.mxu0 0.0
    %840 = vmatprep.subr.mxu0 0.0
    %841 = vmatpush1.msra.mxu0 0.0
    %842 = vmatprep.subr.mxu0 0.0
    %843 = vmatpush1.msra.mxu0 0.0
    %844 = vmatprep.subr.mxu0 0.0
    %845 = vmatpush1.msra.mxu0 0.0
    %846 = vmatprep.subr.mxu0 0.0
    %847 = vmatpush1.msra.mxu0 0.0
    %848 = vmatprep.subr.mxu0 0.0
    %849 = vmatpush1.msra.mxu0 0.0
    %850 = vmatprep.subr.mxu0 0.0
    %851 = vmatpush1.msra.mxu0 0.0
    %852 = vmatprep.mubr.f32.mxu0 0.0
    %853 = vmatmul.mubr.f32.gmra.mrb[0].mxu0 %v786
    %v854 = vpop.f32.mrb[0].mxu0
    %v855 = vadd.f32 0.0, %v854
    %v856 = vpop.f32.mrb[0].mxu0
    %857 = vdwg.mxu0
    %s858 = sld [smem:[#allocation2]]
    %vm859 = vcmp.ge.f32.partialorder %v855, 0.0
    %v860 = vstv %s858
    %v861 = vmul.f32 %v860, %v855
    %v862 = vsel %vm859, %v855, %v861
    %v863 = vld [vmem:[%s2] sm:$0xff]
    %vm864 = vcmask 64512
    %v866 = vsel %vm864, %v862, 0
    %868 = vmatprep.subr.mxu0 0.0
    %869 = vmatpush1.msra.mxu0 %v863
    %870 = vmatprep.subr.mxu0 0.0
    %871 = vmatpush1.msra.mxu0 0.0
    %872 = vmatprep.subr.mxu0 0.0
    %873 = vmatpush1.msra.mxu0 0.0
    %874 = vmatprep.subr.mxu0 0.0
    %875 = vmatpush1.msra.mxu0 0.0
    %876 = vmatprep.subr.mxu0 0.0
    %877 = vmatpush1.msra.mxu0 0.0
    %878 = vmatprep.subr.mxu0 0.0
    %879 = vmatpush1.msra.mxu0 0.0
    %880 = vmatprep.subr.mxu0 0.0
    %881 = vmatpush1.msra.mxu0 0.0
    %882 = vmatprep.subr.mxu0 0.0
    %883 = vmatpush1.msra.mxu0 0.0
    %884 = vmatprep.subr.mxu0 0.0
    %885 = vmatpush1.msra.mxu0 0.0
    %886 = vmatprep.subr.mxu0 0.0
    %887 = vmatpush1.msra.mxu0 0.0
    %888 = vmatprep.subr.mxu0 0.0
    %889 = vmatpush1.msra.mxu0 0.0
    %890 = vmatprep.subr.mxu0 0.0
    %891 = vmatpush1.msra.mxu0 0.0
    %892 = vmatprep.subr.mxu0 0.0
    %893 = vmatpush1.msra.mxu0 0.0
    %894 = vmatprep.subr.mxu0 0.0
    %895 = vmatpush1.msra.mxu0 0.0
    %896 = vmatprep.subr.mxu0 0.0
    %897 = vmatpush1.msra.mxu0 0.0
    %898 = vmatprep.subr.mxu0 0.0
    %899 = vmatpush1.msra.mxu0 0.0
    %900 = vmatprep.subr.mxu0 0.0
    %901 = vmatpush1.msra.mxu0 0.0
    %902 = vmatprep.subr.mxu0 0.0
    %903 = vmatpush1.msra.mxu0 0.0
    %904 = vmatprep.subr.mxu0 0.0
    %905 = vmatpush1.msra.mxu0 0.0
    %906 = vmatprep.subr.mxu0 0.0
    %907 = vmatpush1.msra.mxu0 0.0
    %908 = vmatprep.subr.mxu0 0.0
    %909 = vmatpush1.msra.mxu0 0.0
    %910 = vmatprep.subr.mxu0 0.0
    %911 = vmatpush1.msra.mxu0 0.0
    %912 = vmatprep.subr.mxu0 0.0
    %913 = vmatpush1.msra.mxu0 0.0
    %914 = vmatprep.subr.mxu0 0.0
    %915 = vmatpush1.msra.mxu0 0.0
    %916 = vmatprep.subr.mxu0 0.0
    %917 = vmatpush1.msra.mxu0 0.0
    %918 = vmatprep.subr.mxu0 0.0
    %919 = vmatpush1.msra.mxu0 0.0
    %920 = vmatprep.subr.mxu0 0.0
    %921 = vmatpush1.msra.mxu0 0.0
    %922 = vmatprep.subr.mxu0 0.0
    %923 = vmatpush1.msra.mxu0 0.0
    %924 = vmatprep.subr.mxu0 0.0
    %925 = vmatpush1.msra.mxu0 0.0
    %926 = vmatprep.subr.mxu0 0.0
    %927 = vmatpush1.msra.mxu0 0.0
    %928 = vmatprep.subr.mxu0 0.0
    %929 = vmatpush1.msra.mxu0 0.0
    %930 = vmatprep.subr.mxu0 0.0
    %931 = vmatpush1.msra.mxu0 0.0
    %932 = vmatprep.mubr.f32.mxu0 0.0
    %933 = vmatmul.mubr.f32.gmra.mrb[0].mxu0 %v866
    %v934 = vpop.f32.mrb[0].mxu0
    %v935 = vadd.f32 0.0, %v934
    %v936 = vpop.f32.mrb[0].mxu0
    %937 = vdwg.mxu0
    %v938 = vxor.u32 %v935, 2147483648
    %v939 = vmul.f32 %v938, 1.442695
    %v940 = vpow.pop %v939
    %v941 = vadd.f32 %v940, 1.0
    %v942 = vrcp.pop %v941
    %v943 = vmul.f32 1.0, %v942
    %v944 = vlaneseq
    %v945 = vshrl.u32 %v944, 7
    %v946 = vsub.s32 0, %v945
    %v947 = vrot.slane %v943, %v946
    %949 = vbcast.lane.b32.xlu0 %v947, 256
    %v950 = vpop.permute.xlu0 %949
    %s952 = sor.u32 256, 8
    %953 = vbcast.lane.b32.xlu0 %v947, %s952
    %v954 = vpop.permute.xlu0 %953
    %s956 = sor.u32 256, 16
    %957 = vbcast.lane.b32.xlu0 %v947, %s956
    %v958 = vpop.permute.xlu0 %957
    %s960 = sor.u32 256, 24
    %961 = vbcast.lane.b32.xlu0 %v947, %s960
    %v962 = vpop.permute.xlu0 %961
    %s964 = sor.u32 256, 32
    %965 = vbcast.lane.b32.xlu0 %v947, %s964
    %v966 = vpop.permute.xlu0 %965
    %s968 = sor.u32 256, 40
    %969 = vbcast.lane.b32.xlu0 %v947, %s968
    %v970 = vpop.permute.xlu0 %969
    %s972 = sor.u32 256, 48
    %973 = vbcast.lane.b32.xlu0 %v947, %s972
    %v974 = vpop.permute.xlu0 %973
    %s976 = sor.u32 256, 56
    %977 = vbcast.lane.b32.xlu0 %v947, %s976
    %v978 = vpop.permute.xlu0 %977
    %s980 = sor.u32 256, 64
    %981 = vbcast.lane.b32.xlu0 %v947, %s980
    %v982 = vpop.permute.xlu0 %981
    %s984 = sor.u32 256, 72
    %985 = vbcast.lane.b32.xlu0 %v947, %s984
    %v986 = vpop.permute.xlu0 %985
    %s988 = sor.u32 256, 80
    %989 = vbcast.lane.b32.xlu0 %v947, %s988
    %v990 = vpop.permute.xlu0 %989
    %s992 = sor.u32 256, 88
    %993 = vbcast.lane.b32.xlu0 %v947, %s992
    %v994 = vpop.permute.xlu0 %993
    %s996 = sor.u32 256, 96
    %997 = vbcast.lane.b32.xlu0 %v947, %s996
    %v998 = vpop.permute.xlu0 %997
    %s1000 = sor.u32 256, 104
    %1001 = vbcast.lane.b32.xlu0 %v947, %s1000
    %v1002 = vpop.permute.xlu0 %1001
    %s1004 = sor.u32 256, 112
    %1005 = vbcast.lane.b32.xlu0 %v947, %s1004
    %v1006 = vpop.permute.xlu0 %1005
    %s1008 = sor.u32 256, 120
    %1009 = vbcast.lane.b32.xlu0 %v947, %s1008
    %v1010 = vpop.permute.xlu0 %1009
    %v1011 = vlaneseq
    %v1012 = vshrl.u32 %v1011, 7
    %v1013 = vsub.s32 1, %v1012
    %v1014 = vrot.slane %v943, %v1013
    %1016 = vbcast.lane.b32.xlu0 %v1014, 256
    %v1017 = vpop.permute.xlu0 %1016
    %s1019 = sor.u32 256, 8
    %1020 = vbcast.lane.b32.xlu0 %v1014, %s1019
    %v1021 = vpop.permute.xlu0 %1020
    %s1023 = sor.u32 256, 16
    %1024 = vbcast.lane.b32.xlu0 %v1014, %s1023
    %v1025 = vpop.permute.xlu0 %1024
    %s1027 = sor.u32 256, 24
    %1028 = vbcast.lane.b32.xlu0 %v1014, %s1027
    %v1029 = vpop.permute.xlu0 %1028
    %s1031 = sor.u32 256, 32
    %1032 = vbcast.lane.b32.xlu0 %v1014, %s1031
    %v1033 = vpop.permute.xlu0 %1032
    %s1035 = sor.u32 256, 40
    %1036 = vbcast.lane.b32.xlu0 %v1014, %s1035
    %v1037 = vpop.permute.xlu0 %1036
    %s1039 = sor.u32 256, 48
    %1040 = vbcast.lane.b32.xlu0 %v1014, %s1039
    %v1041 = vpop.permute.xlu0 %1040
    %s1043 = sor.u32 256, 56
    %1044 = vbcast.lane.b32.xlu0 %v1014, %s1043
    %v1045 = vpop.permute.xlu0 %1044
    %s1047 = sor.u32 256, 64
    %1048 = vbcast.lane.b32.xlu0 %v1014, %s1047
    %v1049 = vpop.permute.xlu0 %1048
    %s1051 = sor.u32 256, 72
    %1052 = vbcast.lane.b32.xlu0 %v1014, %s1051
    %v1053 = vpop.permute.xlu0 %1052
    %s1055 = sor.u32 256, 80
    %1056 = vbcast.lane.b32.xlu0 %v1014, %s1055
    %v1057 = vpop.permute.xlu0 %1056
    %s1059 = sor.u32 256, 88
    %1060 = vbcast.lane.b32.xlu0 %v1014, %s1059
    %v1061 = vpop.permute.xlu0 %1060
    %s1063 = sor.u32 256, 96
    %1064 = vbcast.lane.b32.xlu0 %v1014, %s1063
    %v1065 = vpop.permute.xlu0 %1064
    %s1067 = sor.u32 256, 104
    %1068 = vbcast.lane.b32.xlu0 %v1014, %s1067
    %v1069 = vpop.permute.xlu0 %1068
    %s1071 = sor.u32 256, 112
    %1072 = vbcast.lane.b32.xlu0 %v1014, %s1071
    %v1073 = vpop.permute.xlu0 %1072
    %s1075 = sor.u32 256, 120
    %1076 = vbcast.lane.b32.xlu0 %v1014, %s1075
    %v1077 = vpop.permute.xlu0 %1076
    %v1078 = vlaneseq
    %v1079 = vshrl.u32 %v1078, 7
    %v1080 = vsub.s32 2, %v1079
    %v1081 = vrot.slane %v943, %v1080
    %1083 = vbcast.lane.b32.xlu0 %v1081, 256
    %v1084 = vpop.permute.xlu0 %1083
    %s1086 = sor.u32 256, 8
    %1087 = vbcast.lane.b32.xlu0 %v1081, %s1086
    %v1088 = vpop.permute.xlu0 %1087
    %s1090 = sor.u32 256, 16
    %1091 = vbcast.lane.b32.xlu0 %v1081, %s1090
    %v1092 = vpop.permute.xlu0 %1091
    %s1094 = sor.u32 256, 24
    %1095 = vbcast.lane.b32.xlu0 %v1081, %s1094
    %v1096 = vpop.permute.xlu0 %1095
    %s1098 = sor.u32 256, 32
    %1099 = vbcast.lane.b32.xlu0 %v1081, %s1098
    %v1100 = vpop.permute.xlu0 %1099
    %s1102 = sor.u32 256, 40
    %1103 = vbcast.lane.b32.xlu0 %v1081, %s1102
    %v1104 = vpop.permute.xlu0 %1103
    %s1106 = sor.u32 256, 48
    %1107 = vbcast.lane.b32.xlu0 %v1081, %s1106
    %v1108 = vpop.permute.xlu0 %1107
    %s1110 = sor.u32 256, 56
    %1111 = vbcast.lane.b32.xlu0 %v1081, %s1110
    %v1112 = vpop.permute.xlu0 %1111
    %s1114 = sor.u32 256, 64
    %1115 = vbcast.lane.b32.xlu0 %v1081, %s1114
    %v1116 = vpop.permute.xlu0 %1115
    %s1118 = sor.u32 256, 72
    %1119 = vbcast.lane.b32.xlu0 %v1081, %s1118
    %v1120 = vpop.permute.xlu0 %1119
    %s1122 = sor.u32 256, 80
    %1123 = vbcast.lane.b32.xlu0 %v1081, %s1122
    %v1124 = vpop.permute.xlu0 %1123
    %s1126 = sor.u32 256, 88
    %1127 = vbcast.lane.b32.xlu0 %v1081, %s1126
    %v1128 = vpop.permute.xlu0 %1127
    %s1130 = sor.u32 256, 96
    %1131 = vbcast.lane.b32.xlu0 %v1081, %s1130
    %v1132 = vpop.permute.xlu0 %1131
    %s1134 = sor.u32 256, 104
    %1135 = vbcast.lane.b32.xlu0 %v1081, %s1134
    %v1136 = vpop.permute.xlu0 %1135
    %s1138 = sor.u32 256, 112
    %1139 = vbcast.lane.b32.xlu0 %v1081, %s1138
    %v1140 = vpop.permute.xlu0 %1139
    %s1142 = sor.u32 256, 120
    %1143 = vbcast.lane.b32.xlu0 %v1081, %s1142
    %v1144 = vpop.permute.xlu0 %1143
    %v1145 = vlaneseq
    %v1146 = vshrl.u32 %v1145, 7
    %v1147 = vsub.s32 3, %v1146
    %v1148 = vrot.slane %v943, %v1147
    %1150 = vbcast.lane.b32.xlu0 %v1148, 256
    %v1151 = vpop.permute.xlu0 %1150
    %s1153 = sor.u32 256, 8
    %1154 = vbcast.lane.b32.xlu0 %v1148, %s1153
    %v1155 = vpop.permute.xlu0 %1154
    %s1157 = sor.u32 256, 16
    %1158 = vbcast.lane.b32.xlu0 %v1148, %s1157
    %v1159 = vpop.permute.xlu0 %1158
    %s1161 = sor.u32 256, 24
    %1162 = vbcast.lane.b32.xlu0 %v1148, %s1161
    %v1163 = vpop.permute.xlu0 %1162
    %s1165 = sor.u32 256, 32
    %1166 = vbcast.lane.b32.xlu0 %v1148, %s1165
    %v1167 = vpop.permute.xlu0 %1166
    %s1169 = sor.u32 256, 40
    %1170 = vbcast.lane.b32.xlu0 %v1148, %s1169
    %v1171 = vpop.permute.xlu0 %1170
    %s1173 = sor.u32 256, 48
    %1174 = vbcast.lane.b32.xlu0 %v1148, %s1173
    %v1175 = vpop.permute.xlu0 %1174
    %s1177 = sor.u32 256, 56
    %1178 = vbcast.lane.b32.xlu0 %v1148, %s1177
    %v1179 = vpop.permute.xlu0 %1178
    %s1181 = sor.u32 256, 64
    %1182 = vbcast.lane.b32.xlu0 %v1148, %s1181
    %v1183 = vpop.permute.xlu0 %1182
    %s1185 = sor.u32 256, 72
    %1186 = vbcast.lane.b32.xlu0 %v1148, %s1185
    %v1187 = vpop.permute.xlu0 %1186
    %s1189 = sor.u32 256, 80
    %1190 = vbcast.lane.b32.xlu0 %v1148, %s1189
    %v1191 = vpop.permute.xlu0 %1190
    %s1193 = sor.u32 256, 88
    %1194 = vbcast.lane.b32.xlu0 %v1148, %s1193
    %v1195 = vpop.permute.xlu0 %1194
    %s1197 = sor.u32 256, 96
    %1198 = vbcast.lane.b32.xlu0 %v1148, %s1197
    %v1199 = vpop.permute.xlu0 %1198
    %s1201 = sor.u32 256, 104
    %1202 = vbcast.lane.b32.xlu0 %v1148, %s1201
    %v1203 = vpop.permute.xlu0 %1202
    %s1205 = sor.u32 256, 112
    %1206 = vbcast.lane.b32.xlu0 %v1148, %s1205
    %v1207 = vpop.permute.xlu0 %1206
    %s1209 = sor.u32 256, 120
    %1210 = vbcast.lane.b32.xlu0 %v1148, %s1209
    %v1211 = vpop.permute.xlu0 %1210
    %v1212 = vmul.f32 %v33, %v950
    %v1213 = vmul.f32 %v34, %v950
    %v1214 = vmul.f32 %v35, %v954
    %v1215 = vmul.f32 %v36, %v954
    %v1216 = vmul.f32 %v37, %v958
    %v1217 = vmul.f32 %v38, %v958
    %v1218 = vmul.f32 %v39, %v962
    %v1219 = vmul.f32 %v40, %v962
    %v1220 = vmul.f32 %v41, %v966
    %v1221 = vmul.f32 %v42, %v966
    %v1222 = vmul.f32 %v43, %v970
    %v1223 = vmul.f32 %v44, %v970
    %v1224 = vmul.f32 %v45, %v974
    %v1225 = vmul.f32 %v46, %v974
    %v1226 = vmul.f32 %v47, %v978
    %v1227 = vmul.f32 %v48, %v978
    %v1228 = vmul.f32 %v49, %v982
    %v1229 = vmul.f32 %v50, %v982
    %v1230 = vmul.f32 %v51, %v986
    %v1231 = vmul.f32 %v52, %v986
    %v1232 = vmul.f32 %v53, %v990
    %v1233 = vmul.f32 %v54, %v990
    %v1234 = vmul.f32 %v55, %v994
    %v1235 = vmul.f32 %v56, %v994
    %v1236 = vmul.f32 %v57, %v998
    %v1237 = vmul.f32 %v58, %v998
    %v1238 = vmul.f32 %v59, %v1002
    %v1239 = vmul.f32 %v60, %v1002
    %v1240 = vmul.f32 %v61, %v1006
    %v1241 = vmul.f32 %v62, %v1006
    %v1242 = vmul.f32 %v63, %v1010
    %v1243 = vmul.f32 %v64, %v1010
    %v1244 = vmul.f32 %v65, %v1017
    %v1245 = vmul.f32 %v66, %v1017
    %v1246 = vmul.f32 %v67, %v1021
    %v1247 = vmul.f32 %v68, %v1021
    %v1248 = vmul.f32 %v69, %v1025
    %v1249 = vmul.f32 %v70, %v1025
    %v1250 = vmul.f32 %v71, %v1029
    %v1251 = vmul.f32 %v72, %v1029
    %v1252 = vmul.f32 %v73, %v1033
    %v1253 = vmul.f32 %v74, %v1033
    %v1254 = vmul.f32 %v75, %v1037
    %v1255 = vmul.f32 %v76, %v1037
    %v1256 = vmul.f32 %v77, %v1041
    %v1257 = vmul.f32 %v78, %v1041
    %v1258 = vmul.f32 %v79, %v1045
    %v1259 = vmul.f32 %v80, %v1045
    %v1260 = vmul.f32 %v81, %v1049
    %v1261 = vmul.f32 %v82, %v1049
    %v1262 = vmul.f32 %v83, %v1053
    %v1263 = vmul.f32 %v84, %v1053
    %v1264 = vmul.f32 %v85, %v1057
    %v1265 = vmul.f32 %v86, %v1057
    %v1266 = vmul.f32 %v87, %v1061
    %v1267 = vmul.f32 %v88, %v1061
    %v1268 = vmul.f32 %v89, %v1065
    %v1269 = vmul.f32 %v90, %v1065
    %v1270 = vmul.f32 %v91, %v1069
    %v1271 = vmul.f32 %v92, %v1069
    %v1272 = vmul.f32 %v93, %v1073
    %v1273 = vmul.f32 %v94, %v1073
    %v1274 = vmul.f32 %v95, %v1077
    %v1275 = vmul.f32 %v96, %v1077
    %v1276 = vmul.f32 %v97, %v1084
    %v1277 = vmul.f32 %v98, %v1084
    %v1278 = vmul.f32 %v99, %v1088
    %v1279 = vmul.f32 %v100, %v1088
    %v1280 = vmul.f32 %v101, %v1092
    %v1281 = vmul.f32 %v102, %v1092
    %v1282 = vmul.f32 %v103, %v1096
    %v1283 = vmul.f32 %v104, %v1096
    %v1284 = vmul.f32 %v105, %v1100
    %v1285 = vmul.f32 %v106, %v1100
    %v1286 = vmul.f32 %v107, %v1104
    %v1287 = vmul.f32 %v108, %v1104
    %v1288 = vmul.f32 %v109, %v1108
    %v1289 = vmul.f32 %v110, %v1108
    %v1290 = vmul.f32 %v111, %v1112
    %v1291 = vmul.f32 %v112, %v1112
    %v1292 = vmul.f32 %v113, %v1116
    %v1293 = vmul.f32 %v114, %v1116
    %v1294 = vmul.f32 %v115, %v1120
    %v1295 = vmul.f32 %v116, %v1120
    %v1296 = vmul.f32 %v117, %v1124
    %v1297 = vmul.f32 %v118, %v1124
    %v1298 = vmul.f32 %v119, %v1128
    %v1299 = vmul.f32 %v120, %v1128
    %v1300 = vmul.f32 %v121, %v1132
    %v1301 = vmul.f32 %v122, %v1132
    %v1302 = vmul.f32 %v123, %v1136
    %v1303 = vmul.f32 %v124, %v1136
    %v1304 = vmul.f32 %v125, %v1140
    %v1305 = vmul.f32 %v126, %v1140
    %v1306 = vmul.f32 %v127, %v1144
    %v1307 = vmul.f32 %v128, %v1144
    %v1308 = vmul.f32 %v129, %v1151
    %v1309 = vmul.f32 %v130, %v1151
    %v1310 = vmul.f32 %v131, %v1155
    %v1311 = vmul.f32 %v132, %v1155
    %v1312 = vmul.f32 %v133, %v1159
    %v1313 = vmul.f32 %v134, %v1159
    %v1314 = vmul.f32 %v135, %v1163
    %v1315 = vmul.f32 %v136, %v1163
    %v1316 = vmul.f32 %v137, %v1167
    %v1317 = vmul.f32 %v138, %v1167
    %v1318 = vmul.f32 %v139, %v1171
    %v1319 = vmul.f32 %v140, %v1171
    %v1320 = vmul.f32 %v141, %v1175
    %v1321 = vmul.f32 %v142, %v1175
    %v1322 = vmul.f32 %v143, %v1179
    %v1323 = vmul.f32 %v144, %v1179
    %v1324 = vmul.f32 %v145, %v1183
    %v1325 = vmul.f32 %v146, %v1183
    %v1326 = vmul.f32 %v147, %v1187
    %v1327 = vmul.f32 %v148, %v1187
    %v1328 = vmul.f32 %v149, %v1191
    %v1329 = vmul.f32 %v150, %v1191
    %v1330 = vmul.f32 %v151, %v1195
    %v1331 = vmul.f32 %v152, %v1195
    %v1332 = vmul.f32 %v153, %v1199
    %v1333 = vmul.f32 %v154, %v1199
    %v1334 = vmul.f32 %v155, %v1203
    %v1335 = vmul.f32 %v156, %v1203
    %v1336 = vmul.f32 %v157, %v1207
    %v1337 = vmul.f32 %v158, %v1207
    %v1338 = vmul.f32 %v159, %v1211
    %v1339 = vmul.f32 %v160, %v1211
    %1340 = vst [vmem:[#allocation6] sm:$0xff] %v1212
    %1341 = vst [vmem:[#allocation6 + $0x8] sm:$0xff] %v1213
    %1342 = vst [vmem:[#allocation6 + $0x10] sm:$0xff] %v1214
    %1343 = vst [vmem:[#allocation6 + $0x18] sm:$0xff] %v1215
    %1344 = vst [vmem:[#allocation6 + $0x20] sm:$0xff] %v1216
    %1345 = vst [vmem:[#allocation6 + $0x28] sm:$0xff] %v1217
    %1346 = vst [vmem:[#allocation6 + $0x30] sm:$0xff] %v1218
    %1347 = vst [vmem:[#allocation6 + $0x38] sm:$0xff] %v1219
    %1348 = vst [vmem:[#allocation6 + $0x40] sm:$0xff] %v1220
    %1349 = vst [vmem:[#allocation6 + $0x48] sm:$0xff] %v1221
    %1350 = vst [vmem:[#allocation6 + $0x50] sm:$0xff] %v1222
    %1351 = vst [vmem:[#allocation6 + $0x58] sm:$0xff] %v1223
    %1352 = vst [vmem:[#allocation6 + $0x60] sm:$0xff] %v1224
    %1353 = vst [vmem:[#allocation6 + $0x68] sm:$0xff] %v1225
    %1354 = vst [vmem:[#allocation6 + $0x70] sm:$0xff] %v1226
    %1355 = vst [vmem:[#allocation6 + $0x78] sm:$0xff] %v1227
    %1356 = vst [vmem:[#allocation6 + $0x80] sm:$0xff] %v1228
    %1357 = vst [vmem:[#allocation6 + $0x88] sm:$0xff] %v1229
    %1358 = vst [vmem:[#allocation6 + $0x90] sm:$0xff] %v1230
    %1359 = vst [vmem:[#allocation6 + $0x98] sm:$0xff] %v1231
    %1360 = vst [vmem:[#allocation6 + $0xa0] sm:$0xff] %v1232
    %1361 = vst [vmem:[#allocation6 + $0xa8] sm:$0xff] %v1233
    %1362 = vst [vmem:[#allocation6 + $0xb0] sm:$0xff] %v1234
    %1363 = vst [vmem:[#allocation6 + $0xb8] sm:$0xff] %v1235
    %1364 = vst [vmem:[#allocation6 + $0xc0] sm:$0xff] %v1236
    %1365 = vst [vmem:[#allocation6 + $0xc8] sm:$0xff] %v1237
    %1366 = vst [vmem:[#allocation6 + $0xd0] sm:$0xff] %v1238
    %1367 = vst [vmem:[#allocation6 + $0xd8] sm:$0xff] %v1239
    %1368 = vst [vmem:[#allocation6 + $0xe0] sm:$0xff] %v1240
    %1369 = vst [vmem:[#allocation6 + $0xe8] sm:$0xff] %v1241
    %1370 = vst [vmem:[#allocation6 + $0xf0] sm:$0xff] %v1242
    %1371 = vst [vmem:[#allocation6 + $0xf8] sm:$0xff] %v1243
    %1372 = vst [vmem:[#allocation6 + $0x100] sm:$0xff] %v1244
    %1373 = vst [vmem:[#allocation6 + $0x108] sm:$0xff] %v1245
    %1374 = vst [vmem:[#allocation6 + $0x110] sm:$0xff] %v1246
    %1375 = vst [vmem:[#allocation6 + $0x118] sm:$0xff] %v1247
    %1376 = vst [vmem:[#allocation6 + $0x120] sm:$0xff] %v1248
    %1377 = vst [vmem:[#allocation6 + $0x128] sm:$0xff] %v1249
    %1378 = vst [vmem:[#allocation6 + $0x130] sm:$0xff] %v1250
    %1379 = vst [vmem:[#allocation6 + $0x138] sm:$0xff] %v1251
    %1380 = vst [vmem:[#allocation6 + $0x140] sm:$0xff] %v1252
    %1381 = vst [vmem:[#allocation6 + $0x148] sm:$0xff] %v1253
    %1382 = vst [vmem:[#allocation6 + $0x150] sm:$0xff] %v1254
    %1383 = vst [vmem:[#allocation6 + $0x158] sm:$0xff] %v1255
    %1384 = vst [vmem:[#allocation6 + $0x160] sm:$0xff] %v1256
    %1385 = vst [vmem:[#allocation6 + $0x168] sm:$0xff] %v1257
    %1386 = vst [vmem:[#allocation6 + $0x170] sm:$0xff] %v1258
    %1387 = vst [vmem:[#allocation6 + $0x178] sm:$0xff] %v1259
    %1388 = vst [vmem:[#allocation6 + $0x180] sm:$0xff] %v1260
    %1389 = vst [vmem:[#allocation6 + $0x188] sm:$0xff] %v1261
    %1390 = vst [vmem:[#allocation6 + $0x190] sm:$0xff] %v1262
    %1391 = vst [vmem:[#allocation6 + $0x198] sm:$0xff] %v1263
    %1392 = vst [vmem:[#allocation6 + $0x1a0] sm:$0xff] %v1264
    %1393 = vst [vmem:[#allocation6 + $0x1a8] sm:$0xff] %v1265
    %1394 = vst [vmem:[#allocation6 + $0x1b0] sm:$0xff] %v1266
    %1395 = vst [vmem:[#allocation6 + $0x1b8] sm:$0xff] %v1267
    %1396 = vst [vmem:[#allocation6 + $0x1c0] sm:$0xff] %v1268
    %1397 = vst [vmem:[#allocation6 + $0x1c8] sm:$0xff] %v1269
    %1398 = vst [vmem:[#allocation6 + $0x1d0] sm:$0xff] %v1270
    %1399 = vst [vmem:[#allocation6 + $0x1d8] sm:$0xff] %v1271
    %1400 = vst [vmem:[#allocation6 + $0x1e0] sm:$0xff] %v1272
    %1401 = vst [vmem:[#allocation6 + $0x1e8] sm:$0xff] %v1273
    %1402 = vst [vmem:[#allocation6 + $0x1f0] sm:$0xff] %v1274
    %1403 = vst [vmem:[#allocation6 + $0x1f8] sm:$0xff] %v1275
    %1404 = vst [vmem:[#allocation6 + $0x200] sm:$0xff] %v1276
    %1405 = vst [vmem:[#allocation6 + $0x208] sm:$0xff] %v1277
    %1406 = vst [vmem:[#allocation6 + $0x210] sm:$0xff] %v1278
    %1407 = vst [vmem:[#allocation6 + $0x218] sm:$0xff] %v1279
    %1408 = vst [vmem:[#allocation6 + $0x220] sm:$0xff] %v1280
    %1409 = vst [vmem:[#allocation6 + $0x228] sm:$0xff] %v1281
    %1410 = vst [vmem:[#allocation6 + $0x230] sm:$0xff] %v1282
    %1411 = vst [vmem:[#allocation6 + $0x238] sm:$0xff] %v1283
    %1412 = vst [vmem:[#allocation6 + $0x240] sm:$0xff] %v1284
    %1413 = vst [vmem:[#allocation6 + $0x248] sm:$0xff] %v1285
    %1414 = vst [vmem:[#allocation6 + $0x250] sm:$0xff] %v1286
    %1415 = vst [vmem:[#allocation6 + $0x258] sm:$0xff] %v1287
    %1416 = vst [vmem:[#allocation6 + $0x260] sm:$0xff] %v1288
    %1417 = vst [vmem:[#allocation6 + $0x268] sm:$0xff] %v1289
    %1418 = vst [vmem:[#allocation6 + $0x270] sm:$0xff] %v1290
    %1419 = vst [vmem:[#allocation6 + $0x278] sm:$0xff] %v1291
    %1420 = vst [vmem:[#allocation6 + $0x280] sm:$0xff] %v1292
    %1421 = vst [vmem:[#allocation6 + $0x288] sm:$0xff] %v1293
    %1422 = vst [vmem:[#allocation6 + $0x290] sm:$0xff] %v1294
    %1423 = vst [vmem:[#allocation6 + $0x298] sm:$0xff] %v1295
    %1424 = vst [vmem:[#allocation6 + $0x2a0] sm:$0xff] %v1296
    %1425 = vst [vmem:[#allocation6 + $0x2a8] sm:$0xff] %v1297
    %1426 = vst [vmem:[#allocation6 + $0x2b0] sm:$0xff] %v1298
    %1427 = vst [vmem:[#allocation6 + $0x2b8] sm:$0xff] %v1299
    %1428 = vst [vmem:[#allocation6 + $0x2c0] sm:$0xff] %v1300
    %1429 = vst [vmem:[#allocation6 + $0x2c8] sm:$0xff] %v1301
    %1430 = vst [vmem:[#allocation6 + $0x2d0] sm:$0xff] %v1302
    %1431 = vst [vmem:[#allocation6 + $0x2d8] sm:$0xff] %v1303
    %1432 = vst [vmem:[#allocation6 + $0x2e0] sm:$0xff] %v1304
    %1433 = vst [vmem:[#allocation6 + $0x2e8] sm:$0xff] %v1305
    %1434 = vst [vmem:[#allocation6 + $0x2f0] sm:$0xff] %v1306
    %1435 = vst [vmem:[#allocation6 + $0x2f8] sm:$0xff] %v1307
    %1436 = vst [vmem:[#allocation6 + $0x300] sm:$0xff] %v1308
    %1437 = vst [vmem:[#allocation6 + $0x308] sm:$0xff] %v1309
    %1438 = vst [vmem:[#allocation6 + $0x310] sm:$0xff] %v1310
    %1439 = vst [vmem:[#allocation6 + $0x318] sm:$0xff] %v1311
    %1440 = vst [vmem:[#allocation6 + $0x320] sm:$0xff] %v1312
    %1441 = vst [vmem:[#allocation6 + $0x328] sm:$0xff] %v1313
    %1442 = vst [vmem:[#allocation6 + $0x330] sm:$0xff] %v1314
    %1443 = vst [vmem:[#allocation6 + $0x338] sm:$0xff] %v1315
    %1444 = vst [vmem:[#allocation6 + $0x340] sm:$0xff] %v1316
    %1445 = vst [vmem:[#allocation6 + $0x348] sm:$0xff] %v1317
    %1446 = vst [vmem:[#allocation6 + $0x350] sm:$0xff] %v1318
    %1447 = vst [vmem:[#allocation6 + $0x358] sm:$0xff] %v1319
    %1448 = vst [vmem:[#allocation6 + $0x360] sm:$0xff] %v1320
    %1449 = vst [vmem:[#allocation6 + $0x368] sm:$0xff] %v1321
    %1450 = vst [vmem:[#allocation6 + $0x370] sm:$0xff] %v1322
    %1451 = vst [vmem:[#allocation6 + $0x378] sm:$0xff] %v1323
    %1452 = vst [vmem:[#allocation6 + $0x380] sm:$0xff] %v1324
    %1453 = vst [vmem:[#allocation6 + $0x388] sm:$0xff] %v1325
    %1454 = vst [vmem:[#allocation6 + $0x390] sm:$0xff] %v1326
    %1455 = vst [vmem:[#allocation6 + $0x398] sm:$0xff] %v1327
    %1456 = vst [vmem:[#allocation6 + $0x3a0] sm:$0xff] %v1328
    %1457 = vst [vmem:[#allocation6 + $0x3a8] sm:$0xff] %v1329
    %1458 = vst [vmem:[#allocation6 + $0x3b0] sm:$0xff] %v1330
    %1459 = vst [vmem:[#allocation6 + $0x3b8] sm:$0xff] %v1331
    %1460 = vst [vmem:[#allocation6 + $0x3c0] sm:$0xff] %v1332
    %1461 = vst [vmem:[#allocation6 + $0x3c8] sm:$0xff] %v1333
    %1462 = vst [vmem:[#allocation6 + $0x3d0] sm:$0xff] %v1334
    %1463 = vst [vmem:[#allocation6 + $0x3d8] sm:$0xff] %v1335
    %1464 = vst [vmem:[#allocation6 + $0x3e0] sm:$0xff] %v1336
    %1465 = vst [vmem:[#allocation6 + $0x3e8] sm:$0xff] %v1337
    %1466 = vst [vmem:[#allocation6 + $0x3f0] sm:$0xff] %v1338
    %1467 = vst [vmem:[#allocation6 + $0x3f8] sm:$0xff] %v1339
    // Predicated region
    $region22: #{tpu_custom_call.1} parent=1 // pred_check
      _
    $region23: #{tpu_custom_call.1} parent=1 // pred_check_branch
      %1469 = sbr.rel (0) target = $region25
    $region24: #{tpu_custom_call.1} parent=1 // pred_region
      %s1471 = ssub.s32 16384, 16384
      %1472 = vsyncadd [#allocation5], %s1471
      %s1473 = sshll.u32 [#allocation6], 4
      %s1474 = int_to_ptr.vmem [resolvable:$true] %s1473
      %1479 = dma.vmem_to_hbm [thread:$0]  %s1474, 16384, %s4, [#allocation5], 256, 256, 16
    $region25: #{tpu_custom_call.1} parent=1 // pred_fallthru
      _
    // Predicated region
    $region26: #{tpu_custom_call.1} parent=1 // pred_check
      _
    $region27: #{tpu_custom_call.1} parent=1 // pred_check_branch
      %1481 = sbr.rel (0) target = $region29
    $region28: #{tpu_custom_call.1} parent=1 // pred_region
      %1482 = dma.done [#allocation5], 16384
    $region29: #{tpu_custom_call.1} parent=1 // pred_fallthru
      _
    %1483 = vsyncpa [#allocation4], 1
    %1484 = vsyncpa [#allocation5], 1

</llo_original>
